<compile_context>
chip_gen: v7x
topology: tpu7x:2x2x1
jax: 0.10.0
libtpu: 0.0.40
codegen_flags: <defaults>
</compile_context>

<pallas_src>
import jax
import jax.numpy as jnp
from jax.experimental import pallas as pl
from jax.experimental.pallas import tpu as pltpu


def _pad_same_3x3(v):
    """Zero-pad a (H, W, C) value by 1 on each spatial side (in-kernel)."""
    H, W, C = v.shape
    zc = jnp.zeros((H, 1, C), v.dtype)
    v = jnp.concatenate([zc, v, zc], axis=1)          # (H, W+2, C)
    zr = jnp.zeros((1, W + 2, C), v.dtype)
    return jnp.concatenate([zr, v, zr], axis=0)       # (H+2, W+2, C)


def _conv3x3_mxu(v, w_ref, b_ref):
    """3x3 'SAME' conv as one MXU matmul with K = 9*C, plus folded-BN bias.

    v      : (H, W, C) f32 value
    w_ref  : (9*C, Cout) VMEM ref, BN scale already folded into the weights
    b_ref  : (1, Cout)   VMEM ref, folded BN bias
    returns: (H*W, Cout) f32
    """
    H, W, C = v.shape
    vp = _pad_same_3x3(v)
    # im2col: 9 shifted views concatenated on the channel (lane) axis.
    # (kh, kw, ci) ordering matches the (9*C, Cout) weight reshape.
    cols = [vp[kh:kh + H, kw:kw + W, :] for kh in range(3) for kw in range(3)]
    col = jnp.concatenate(cols, axis=-1).reshape(H * W, 9 * C)
    y = jnp.dot(col, w_ref[...], preferred_element_type=jnp.float32)
    return y + b_ref[...]


def _basic_block_kernel(x_ref, w1_ref, b1_ref, w2_ref, b2_ref, out_ref):
    """Fused BasicBlock body for one image (one grid step)."""
    _, H, W, Cin = x_ref.shape
    Cmid = w1_ref.shape[1]
    Cout = out_ref.shape[3]

    x = x_ref[0].astype(jnp.float32)                            # (H, W, Cin)

    # conv1 + bn1 + relu  (BN scale folded into w1, bias in b1)
    y1 = jnp.maximum(_conv3x3_mxu(x, w1_ref, b1_ref), 0.0)      # (H*W, Cmid)

    # conv2 + bn2 + identity residual + relu
    y2 = _conv3x3_mxu(y1.reshape(H, W, Cmid), w2_ref, b2_ref)   # (H*W, Cout)
    y2 = y2 + x.reshape(H * W, Cin)                             # inplanes == planes
    y2 = jnp.maximum(y2, 0.0)

    out_ref[...] = y2.reshape(1, H, W, Cout).astype(out_ref.dtype)


def basic_block_forward_nhwc(x_nhwc, params):
    """Fused BasicBlock forward, NHWC in / NHWC out (single pallas_call).

    params: w1, w2 : (3, 3, Cin, Cout) HWIO conv weights
            s1, b1, s2, b2 : folded eval-mode BN scale / bias, shape (C,)
    """
    # TODO(synk): stride>1 / dilation>1 / downsample path not implemented
    # (this BasicBlock instance has stride=1, dilation=1, downsample=None).
    N, H, W, Cin = x_nhwc.shape
    Cmid = params["w1"].shape[-1]
    Cout = params["w2"].shape[-1]
    assert Cin == Cout, "identity residual requires inplanes == planes"

    f32 = jnp.float32
    # Fold eval-mode BN scale into the conv weights; kernel only adds bias.
    w1 = (params["w1"].astype(f32) * params["s1"].astype(f32)).reshape(9 * Cin, Cmid)
    w2 = (params["w2"].astype(f32) * params["s2"].astype(f32)).reshape(9 * Cmid, Cout)
    b1 = params["b1"].reshape(1, Cmid).astype(f32)
    b2 = params["b2"].reshape(1, Cout).astype(f32)

    grid_spec = pltpu.PrefetchScalarGridSpec(
        num_scalar_prefetch=0,
        grid=(N,),  # one image per step -> pipelined DMA, megacore-parallel
        in_specs=[
            pl.BlockSpec((1, H, W, Cin), lambda n: (n, 0, 0, 0)),
            # Weights / biases: constant block index -> VMEM resident,
            # no per-step re-DMA.
            pl.BlockSpec((9 * Cin, Cmid), lambda n: (0, 0)),
            pl.BlockSpec((1, Cmid), lambda n: (0, 0)),
            pl.BlockSpec((9 * Cmid, Cout), lambda n: (0, 0)),
            pl.BlockSpec((1, Cout), lambda n: (0, 0)),
        ],
        out_specs=pl.BlockSpec((1, H, W, Cout), lambda n: (n, 0, 0, 0)),
    )

    return pl.pallas_call(
        _basic_block_kernel,
        out_shape=jax.ShapeDtypeStruct((N, H, W, Cout), x_nhwc.dtype),
        grid_spec=grid_spec,
        compiler_params=pltpu.CompilerParams(
            # Batch axis is independent -> shard across v7x's 2 TensorCores.
            dimension_semantics=("parallel",),
            # Budget derived for v7x's 64 MiB physical VMEM: per-image blocks
            # + im2col temporaries at ResNet BasicBlock sizes stay well below.
            vmem_limit_bytes=48 * 1024 * 1024,
        ),
    )(x_nhwc, w1, b1, w2, b2)


def basic_block_forward(x_nchw, params):
    """NCHW (PyTorch layout) wrapper. When stacking blocks, call
    basic_block_forward_nhwc directly to avoid per-block transposes."""
    x = jnp.transpose(x_nchw, (0, 2, 3, 1))   # NCHW -> NHWC
    out = basic_block_forward_nhwc(x, params)
    return jnp.transpose(out, (0, 3, 1, 2))   # NHWC -> NCHW


def _fold_bn(gamma, beta, mean, var, eps=1e-5):
    scale = gamma / jnp.sqrt(var + eps)
    return scale, beta - mean * scale


def _reference_block(x_nchw, params):
    """Pure-JAX reference (lax conv) for a correctness check."""
    x = jnp.transpose(x_nchw, (0, 2, 3, 1))

    def conv(v, w):
        return jax.lax.conv_general_dilated(
            v, w, window_strides=(1, 1), padding="SAME",
            dimension_numbers=("NHWC", "HWIO", "NHWC"))

    out = jnp.maximum(conv(x, params["w1"]) * params["s1"] + params["b1"], 0.0)
    out = jnp.maximum(
        conv(out, params["w2"]) * params["s2"] + params["b2"] + x, 0.0)
    return jnp.transpose(out, (0, 3, 1, 2))


if __name__ == "__main__":
    # Small shapes consistent with BasicBlock(inplanes=4, planes=4).
    N, C, H, W = 2, 4, 16, 16
    key = jax.random.PRNGKey(0)
    keys = jax.random.split(key, 12)

    x = jax.random.normal(keys[0], (N, C, H, W), dtype=jnp.float32)

    # conv weights, PyTorch OIHW -> HWIO
    w1_oihw = 0.1 * jax.random.normal(keys[1], (C, C, 3, 3), dtype=jnp.float32)
    w2_oihw = 0.1 * jax.random.normal(keys[2], (C, C, 3, 3), dtype=jnp.float32)
    w1 = jnp.transpose(w1_oihw, (2, 3, 1, 0))
    w2 = jnp.transpose(w2_oihw, (2, 3, 1, 0))

    # BN parameters (eval mode), folded to per-channel scale/bias.
    g1 = 1.0 + 0.1 * jax.random.normal(keys[3], (C,), dtype=jnp.float32)
    be1 = 0.1 * jax.random.normal(keys[4], (C,), dtype=jnp.float32)
    m1 = 0.1 * jax.random.normal(keys[5], (C,), dtype=jnp.float32)
    v1 = jax.random.uniform(keys[6], (C,), minval=0.5, maxval=1.5,
                            dtype=jnp.float32)
    g2 = 1.0 + 0.1 * jax.random.normal(keys[7], (C,), dtype=jnp.float32)
    be2 = 0.1 * jax.random.normal(keys[8], (C,), dtype=jnp.float32)
    m2 = 0.1 * jax.random.normal(keys[9], (C,), dtype=jnp.float32)
    v2 = jax.random.uniform(keys[10], (C,), minval=0.5, maxval=1.5,
                            dtype=jnp.float32)

    s1, b1 = _fold_bn(g1, be1, m1, v1)
    s2, b2 = _fold_bn(g2, be2, m2, v2)

    params = dict(w1=w1, w2=w2, s1=s1, b1=b1, s2=s2, b2=b2)

    out = jax.block_until_ready(basic_block_forward(x, params))
    ref = jax.block_until_ready(_reference_block(x, params))

    assert out.shape == (N, C, H, W)
    assert jnp.allclose(out, ref, rtol=1e-4, atol=1e-4), "mismatch vs reference"
    print("KERNEL_OK")
</pallas_src>

<mosaic_0001>
module attributes {stable_mosaic.version = 11 : i64} {
  func.func @_basic_block_kernel(%arg0: i32, %arg1: memref<1x16x16x4xf32, #tpu.memory_space<vmem>>, %arg2: memref<36x4xf32, #tpu.memory_space<vmem>>, %arg3: memref<1x4xf32, #tpu.memory_space<vmem>>, %arg4: memref<36x4xf32, #tpu.memory_space<vmem>>, %arg5: memref<1x4xf32, #tpu.memory_space<vmem>>, %arg6: memref<1x16x16x4xf32, #tpu.memory_space<vmem>>) attributes {dimension_semantics = [#tpu.dimension_semantics<parallel>], iteration_bounds = array<i64: 2>, scalar_prefetch = 0 : i64, scratch_operands = 0 : i64, tpu.core_type = #tpu.core_type<tc>, window_params = [{transform_indices = @transform_0, window_bounds = array<i64: 1, 16, 16, 4>}, {pipeline_mode = #tpu.pipeline_mode<synchronous>, transform_indices = @transform_1, window_bounds = array<i64: 36, 4>}, {pipeline_mode = #tpu.pipeline_mode<synchronous>, transform_indices = @transform_2, window_bounds = array<i64: 1, 4>}, {pipeline_mode = #tpu.pipeline_mode<synchronous>, transform_indices = @transform_3, window_bounds = array<i64: 36, 4>}, {pipeline_mode = #tpu.pipeline_mode<synchronous>, transform_indices = @transform_4, window_bounds = array<i64: 1, 4>}, {transform_indices = @transform_5, window_bounds = array<i64: 1, 16, 16, 4>}]} {
    %c0 = arith.constant 0 : index
    %c0_0 = arith.constant 0 : index
    %c0_1 = arith.constant 0 : index
    %c0_2 = arith.constant 0 : index
    %0 = vector.load %arg1[%c0, %c0_0, %c0_1, %c0_2] : memref<1x16x16x4xf32, #tpu.memory_space<vmem>>, vector<1x16x16x4xf32>
    %1 = vector.shape_cast %0 : vector<1x16x16x4xf32> to vector<16x16x4xf32>
    %cst = arith.constant 0.000000e+00 : f32
    %2 = vector.broadcast %cst : f32 to vector<16x1x4xf32>
    %3 = tpu.concatenate %2, %1, %2 in 1 : vector<16x1x4xf32>, vector<16x16x4xf32>, vector<16x1x4xf32> -> vector<16x18x4xf32>
    %cst_3 = arith.constant 0.000000e+00 : f32
    %4 = vector.broadcast %cst_3 : f32 to vector<1x18x4xf32>
    %5 = tpu.concatenate %4, %3, %4 in 0 : vector<1x18x4xf32>, vector<16x18x4xf32>, vector<1x18x4xf32> -> vector<18x18x4xf32>
    %6 = vector.extract_strided_slice %5 {offsets = [0, 0, 0], sizes = [16, 16, 4], strides = [1, 1, 1]} : vector<18x18x4xf32> to vector<16x16x4xf32>
    %7 = vector.extract_strided_slice %5 {offsets = [0, 1, 0], sizes = [16, 16, 4], strides = [1, 1, 1]} : vector<18x18x4xf32> to vector<16x16x4xf32>
    %8 = vector.extract_strided_slice %5 {offsets = [0, 2, 0], sizes = [16, 16, 4], strides = [1, 1, 1]} : vector<18x18x4xf32> to vector<16x16x4xf32>
    %9 = vector.extract_strided_slice %5 {offsets = [1, 0, 0], sizes = [16, 16, 4], strides = [1, 1, 1]} : vector<18x18x4xf32> to vector<16x16x4xf32>
    %10 = vector.extract_strided_slice %5 {offsets = [1, 1, 0], sizes = [16, 16, 4], strides = [1, 1, 1]} : vector<18x18x4xf32> to vector<16x16x4xf32>
    %11 = vector.extract_strided_slice %5 {offsets = [1, 2, 0], sizes = [16, 16, 4], strides = [1, 1, 1]} : vector<18x18x4xf32> to vector<16x16x4xf32>
    %12 = vector.extract_strided_slice %5 {offsets = [2, 0, 0], sizes = [16, 16, 4], strides = [1, 1, 1]} : vector<18x18x4xf32> to vector<16x16x4xf32>
    %13 = vector.extract_strided_slice %5 {offsets = [2, 1, 0], sizes = [16, 16, 4], strides = [1, 1, 1]} : vector<18x18x4xf32> to vector<16x16x4xf32>
    %14 = vector.extract_strided_slice %5 {offsets = [2, 2, 0], sizes = [16, 16, 4], strides = [1, 1, 1]} : vector<18x18x4xf32> to vector<16x16x4xf32>
    %15 = tpu.concatenate %6, %7, %8, %9, %10, %11, %12, %13, %14 in 2 : vector<16x16x4xf32>, vector<16x16x4xf32>, vector<16x16x4xf32>, vector<16x16x4xf32>, vector<16x16x4xf32>, vector<16x16x4xf32>, vector<16x16x4xf32>, vector<16x16x4xf32>, vector<16x16x4xf32> -> vector<16x16x36xf32>
    %16 = vector.shape_cast %15 : vector<16x16x36xf32> to vector<256x36xf32>
    %c0_4 = arith.constant 0 : index
    %c0_5 = arith.constant 0 : index
    %17 = vector.load %arg2[%c0_4, %c0_5] : memref<36x4xf32, #tpu.memory_space<vmem>>, vector<36x4xf32>
    %cst_6 = arith.constant dense<0.000000e+00> : vector<256x4xf32>
    %18 = tpu.matmul %16, %17, %cst_6 {dimension_numbers = #tpu.dot_dimension_numbers<[1], [0], [0], [1], [0, 0, 1, 1], [], []>} : vector<256x36xf32>, vector<36x4xf32>, vector<256x4xf32> -> vector<256x4xf32>
    %c0_7 = arith.constant 0 : index
    %c0_8 = arith.constant 0 : index
    %19 = vector.load %arg3[%c0_7, %c0_8] : memref<1x4xf32, #tpu.memory_space<vmem>>, vector<1x4xf32>
    %20 = vector.broadcast %19 : vector<1x4xf32> to vector<256x4xf32>
    %21 = arith.addf %18, %20 : vector<256x4xf32>
    %cst_9 = arith.constant 0.000000e+00 : f32
    %22 = vector.broadcast %cst_9 : f32 to vector<256x4xf32>
    %23 = arith.maximumf %21, %22 : vector<256x4xf32>
    %24 = vector.shape_cast %23 : vector<256x4xf32> to vector<16x16x4xf32>
    %cst_10 = arith.constant 0.000000e+00 : f32
    %25 = vector.broadcast %cst_10 : f32 to vector<16x1x4xf32>
    %26 = tpu.concatenate %25, %24, %25 in 1 : vector<16x1x4xf32>, vector<16x16x4xf32>, vector<16x1x4xf32> -> vector<16x18x4xf32>
    %cst_11 = arith.constant 0.000000e+00 : f32
    %27 = vector.broadcast %cst_11 : f32 to vector<1x18x4xf32>
    %28 = tpu.concatenate %27, %26, %27 in 0 : vector<1x18x4xf32>, vector<16x18x4xf32>, vector<1x18x4xf32> -> vector<18x18x4xf32>
    %29 = vector.extract_strided_slice %28 {offsets = [0, 0, 0], sizes = [16, 16, 4], strides = [1, 1, 1]} : vector<18x18x4xf32> to vector<16x16x4xf32>
    %30 = vector.extract_strided_slice %28 {offsets = [0, 1, 0], sizes = [16, 16, 4], strides = [1, 1, 1]} : vector<18x18x4xf32> to vector<16x16x4xf32>
    %31 = vector.extract_strided_slice %28 {offsets = [0, 2, 0], sizes = [16, 16, 4], strides = [1, 1, 1]} : vector<18x18x4xf32> to vector<16x16x4xf32>
    %32 = vector.extract_strided_slice %28 {offsets = [1, 0, 0], sizes = [16, 16, 4], strides = [1, 1, 1]} : vector<18x18x4xf32> to vector<16x16x4xf32>
    %33 = vector.extract_strided_slice %28 {offsets = [1, 1, 0], sizes = [16, 16, 4], strides = [1, 1, 1]} : vector<18x18x4xf32> to vector<16x16x4xf32>
    %34 = vector.extract_strided_slice %28 {offsets = [1, 2, 0], sizes = [16, 16, 4], strides = [1, 1, 1]} : vector<18x18x4xf32> to vector<16x16x4xf32>
    %35 = vector.extract_strided_slice %28 {offsets = [2, 0, 0], sizes = [16, 16, 4], strides = [1, 1, 1]} : vector<18x18x4xf32> to vector<16x16x4xf32>
    %36 = vector.extract_strided_slice %28 {offsets = [2, 1, 0], sizes = [16, 16, 4], strides = [1, 1, 1]} : vector<18x18x4xf32> to vector<16x16x4xf32>
    %37 = vector.extract_strided_slice %28 {offsets = [2, 2, 0], sizes = [16, 16, 4], strides = [1, 1, 1]} : vector<18x18x4xf32> to vector<16x16x4xf32>
    %38 = tpu.concatenate %29, %30, %31, %32, %33, %34, %35, %36, %37 in 2 : vector<16x16x4xf32>, vector<16x16x4xf32>, vector<16x16x4xf32>, vector<16x16x4xf32>, vector<16x16x4xf32>, vector<16x16x4xf32>, vector<16x16x4xf32>, vector<16x16x4xf32>, vector<16x16x4xf32> -> vector<16x16x36xf32>
    %39 = vector.shape_cast %38 : vector<16x16x36xf32> to vector<256x36xf32>
    %c0_12 = arith.constant 0 : index
    %c0_13 = arith.constant 0 : index
    %40 = vector.load %arg4[%c0_12, %c0_13] : memref<36x4xf32, #tpu.memory_space<vmem>>, vector<36x4xf32>
    %cst_14 = arith.constant dense<0.000000e+00> : vector<256x4xf32>
    %41 = tpu.matmul %39, %40, %cst_14 {dimension_numbers = #tpu.dot_dimension_numbers<[1], [0], [0], [1], [0, 0, 1, 1], [], []>} : vector<256x36xf32>, vector<36x4xf32>, vector<256x4xf32> -> vector<256x4xf32>
    %c0_15 = arith.constant 0 : index
    %c0_16 = arith.constant 0 : index
    %42 = vector.load %arg5[%c0_15, %c0_16] : memref<1x4xf32, #tpu.memory_space<vmem>>, vector<1x4xf32>
    %43 = vector.broadcast %42 : vector<1x4xf32> to vector<256x4xf32>
    %44 = arith.addf %41, %43 : vector<256x4xf32>
    %45 = vector.shape_cast %1 : vector<16x16x4xf32> to vector<256x4xf32>
    %46 = arith.addf %44, %45 : vector<256x4xf32>
    %cst_17 = arith.constant 0.000000e+00 : f32
    %47 = vector.broadcast %cst_17 : f32 to vector<256x4xf32>
    %48 = arith.maximumf %46, %47 : vector<256x4xf32>
    %49 = vector.shape_cast %48 : vector<256x4xf32> to vector<1x16x16x4xf32>
    %c0_18 = arith.constant 0 : index
    %c0_19 = arith.constant 0 : index
    %c0_20 = arith.constant 0 : index
    %c0_21 = arith.constant 0 : index
    %50 = vector.load %arg6[%c0_18, %c0_19, %c0_20, %c0_21] : memref<1x16x16x4xf32, #tpu.memory_space<vmem>>, vector<1x16x16x4xf32>
    tpu.vector_store %arg6[%c0_18, %c0_19, %c0_20, %c0_21], %49 {strides = array<i32>} : memref<1x16x16x4xf32, #tpu.memory_space<vmem>>, vector<1x16x16x4xf32>,
    return
  }
  func.func @transform_0(%arg0: i32) -> (i32, i32, i32, i32) {
    %c0_i32 = arith.constant 0 : i32
    %c0_i32_0 = arith.constant 0 : i32
    %c0_i32_1 = arith.constant 0 : i32
    %c0_i32_2 = arith.constant 0 : i32
    return %arg0, %c0_i32, %c0_i32_0, %c0_i32_1 : i32, i32, i32, i32
  }
  func.func @transform_1(%arg0: i32) -> (i32, i32) {
    %c0_i32 = arith.constant 0 : i32
    %c0_i32_0 = arith.constant 0 : i32
    %c0_i32_1 = arith.constant 0 : i32
    return %c0_i32, %c0_i32_0 : i32, i32
  }
  func.func @transform_2(%arg0: i32) -> (i32, i32) {
    %c0_i32 = arith.constant 0 : i32
    %c0_i32_0 = arith.constant 0 : i32
    %c0_i32_1 = arith.constant 0 : i32
    return %c0_i32, %c0_i32_0 : i32, i32
  }
  func.func @transform_3(%arg0: i32) -> (i32, i32) {
    %c0_i32 = arith.constant 0 : i32
    %c0_i32_0 = arith.constant 0 : i32
    %c0_i32_1 = arith.constant 0 : i32
    return %c0_i32, %c0_i32_0 : i32, i32
  }
  func.func @transform_4(%arg0: i32) -> (i32, i32) {
    %c0_i32 = arith.constant 0 : i32
    %c0_i32_0 = arith.constant 0 : i32
    %c0_i32_1 = arith.constant 0 : i32
    return %c0_i32, %c0_i32_0 : i32, i32
  }
  func.func @transform_5(%arg0: i32) -> (i32, i32, i32, i32) {
    %c0_i32 = arith.constant 0 : i32
    %c0_i32_0 = arith.constant 0 : i32
    %c0_i32_1 = arith.constant 0 : i32
    %c0_i32_2 = arith.constant 0 : i32
    return %arg0, %c0_i32, %c0_i32_0, %c0_i32_1 : i32, i32, i32, i32
  }
}

</mosaic_0001>

<llo_original>
// kernel: tpu_custom_call.1
$region0: #{tpu_custom_call.1}
  #allocation0 [shape = 'u32[]', space=smem, size = 0x4, offset = 0x4, fixed_abs, tag = 'smem constant byte address 0x4 - core index']
  #allocation1 [shape = 'u32[144,128]{1,0:T(1,128)}', space=vmem, size = 0x12000, scoped, tag = 'internal scratch']
  %s0 = inlined_call_operand.vmem [shape: f32[2,16,16,4], index: 0, kind: input, shape index: {}]
  %s1 = inlined_call_operand.vmem [shape: f32[36,4], index: 1, kind: input, shape index: {}]
  %s2 = inlined_call_operand.vmem [shape: f32[1,4], index: 2, kind: input, shape index: {}]
  %s3 = inlined_call_operand.vmem [shape: f32[36,4], index: 3, kind: input, shape index: {}]
  %s4 = inlined_call_operand.vmem [shape: f32[1,4], index: 4, kind: input, shape index: {}]
  %s5 = inlined_call_operand.vmem [shape: f32[2,16,16,4], index: 5, kind: output, shape index: {}]
  %s6 = sld [smem:[#allocation0]]
  $region53: #{tpu_custom_call.1} parent=0
    _
  %s8 = ssub.s32 1, %s6
  %s9 = scalar_select 0, %s8, %s6
  loop: start=0, step=1, limit=4
  $region2: #{tpu_custom_call.1} parent=0 // loop_pre_header
    _
  $region3: #{tpu_custom_call.1} parent=0 // loop_header
    %s11 = sphi 0, %s15
    %p12 = scmp.ge.s32.totalorder %s11, 4
    %s21 = sphi 0, %s23
    %s24 = sphi 0, %s21
    %s25 = sphi 0, %s24
    %s41 = sphi 0, %s25
    %s45 = sphi 0, %s45
    %s47 = sphi 0, %s45
    %s48 = sphi 0, %s47
    %s62 = sphi 0, %s48
    %s66 = sphi 0, %s66
    %s68 = sphi 0, %s66
    %s69 = sphi 0, %s68
    %s83 = sphi 0, %s69
    %s87 = sphi 0, %s87
    %s89 = sphi 0, %s87
    %s90 = sphi 0, %s89
    %s104 = sphi 0, %s90
    %s108 = sphi 0, %s108
    %s110 = sphi 0, %s108
    %s111 = sphi 0, %s110
    %s125 = sphi 0, %s111
    %s131 = sphi 0, %s133
    %s134 = sphi 0, %s131
    %s135 = sphi 0, %s134
    %s151 = sphi 0, %s135
  $region4: #{tpu_custom_call.1} parent=0 // loop_header_branch
    %14 = sbr.rel (%p12) target = $region8
  $region5: #{tpu_custom_call.1} parent=0 // loop_body
    %s16 = ssub.s32 %s11, 1
    %s17 = ssub.s32 %s11, 2
    %s18 = sadd.s32 %s11, 1
    %s19 = ssub.s32 %s11, %s18
    %p20 = scmp.eq.s32.totalorder %s19, 0
    %s22 = sadd.s32 %s21, 1
    %s23 = scalar_select %p20, %s21, %s22
    %p26 = pneg %p20
    %p27 = scmp.eq.s32.totalorder %s11, 1
    %p28 = por %p26, %p27
    %p29 = scmp.ne.s32.totalorder %s21, %s24
    %p30 = scmp.eq.s32.totalorder %s11, 0
    %p31 = por %p29, %p30
    %p32 = scmp.ne.s32.totalorder %s21, %s24
    %p33 = scmp.eq.s32.totalorder %s16, 1
    %p34 = por %p32, %p33
    %p35 = scmp.ne.s32.totalorder %s24, %s25
    %p36 = scmp.eq.s32.totalorder %s16, 0
    %p37 = por %p35, %p36
    %p38 = scmp.ne.s32.totalorder %s24, %s25
    %p39 = scmp.eq.s32.totalorder %s17, 1
    %p40 = por %p38, %p39
    %p42 = scmp.ne.s32.totalorder %s25, %s41
    %p43 = scmp.eq.s32.totalorder %s17, 0
    %p44 = por %p42, %p43
    %s46 = sadd.s32 %s45, 1
    %p49 = scmp.eq.s32.totalorder %s11, 1
    %p50 = scmp.ne.s32.totalorder %s45, %s47
    %p51 = scmp.eq.s32.totalorder %s11, 0
    %p52 = por %p50, %p51
    %p53 = scmp.ne.s32.totalorder %s45, %s47
    %p54 = scmp.eq.s32.totalorder %s16, 1
    %p55 = por %p53, %p54
    %p56 = scmp.ne.s32.totalorder %s47, %s48
    %p57 = scmp.eq.s32.totalorder %s16, 0
    %p58 = por %p56, %p57
    %p59 = scmp.ne.s32.totalorder %s47, %s48
    %p60 = scmp.eq.s32.totalorder %s17, 1
    %p61 = por %p59, %p60
    %p63 = scmp.ne.s32.totalorder %s48, %s62
    %p64 = scmp.eq.s32.totalorder %s17, 0
    %p65 = por %p63, %p64
    %s67 = sadd.s32 %s66, 1
    %p70 = scmp.eq.s32.totalorder %s11, 1
    %p71 = scmp.ne.s32.totalorder %s66, %s68
    %p72 = scmp.eq.s32.totalorder %s11, 0
    %p73 = por %p71, %p72
    %p74 = scmp.ne.s32.totalorder %s66, %s68
    %p75 = scmp.eq.s32.totalorder %s16, 1
    %p76 = por %p74, %p75
    %p77 = scmp.ne.s32.totalorder %s68, %s69
    %p78 = scmp.eq.s32.totalorder %s16, 0
    %p79 = por %p77, %p78
    %p80 = scmp.ne.s32.totalorder %s68, %s69
    %p81 = scmp.eq.s32.totalorder %s17, 1
    %p82 = por %p80, %p81
    %p84 = scmp.ne.s32.totalorder %s69, %s83
    %p85 = scmp.eq.s32.totalorder %s17, 0
    %p86 = por %p84, %p85
    %s88 = sadd.s32 %s87, 1
    %p91 = scmp.eq.s32.totalorder %s11, 1
    %p92 = scmp.ne.s32.totalorder %s87, %s89
    %p93 = scmp.eq.s32.totalorder %s11, 0
    %p94 = por %p92, %p93
    %p95 = scmp.ne.s32.totalorder %s87, %s89
    %p96 = scmp.eq.s32.totalorder %s16, 1
    %p97 = por %p95, %p96
    %p98 = scmp.ne.s32.totalorder %s89, %s90
    %p99 = scmp.eq.s32.totalorder %s16, 0
    %p100 = por %p98, %p99
    %p101 = scmp.ne.s32.totalorder %s89, %s90
    %p102 = scmp.eq.s32.totalorder %s17, 1
    %p103 = por %p101, %p102
    %p105 = scmp.ne.s32.totalorder %s90, %s104
    %p106 = scmp.eq.s32.totalorder %s17, 0
    %p107 = por %p105, %p106
    %s109 = sadd.s32 %s108, 1
    %p112 = scmp.eq.s32.totalorder %s11, 1
    %p113 = scmp.ne.s32.totalorder %s108, %s110
    %p114 = scmp.eq.s32.totalorder %s11, 0
    %p115 = por %p113, %p114
    %p116 = scmp.ne.s32.totalorder %s108, %s110
    %p117 = scmp.eq.s32.totalorder %s16, 1
    %p118 = por %p116, %p117
    %p119 = scmp.ne.s32.totalorder %s110, %s111
    %p120 = scmp.eq.s32.totalorder %s16, 0
    %p121 = por %p119, %p120
    %p122 = scmp.ne.s32.totalorder %s110, %s111
    %p123 = scmp.eq.s32.totalorder %s17, 1
    %p124 = por %p122, %p123
    %p126 = scmp.ne.s32.totalorder %s111, %s125
    %p127 = scmp.eq.s32.totalorder %s17, 0
    %p128 = por %p126, %p127
    %s129 = ssub.s32 %s11, %s18
    %p130 = scmp.eq.s32.totalorder %s129, 0
    %s132 = sadd.s32 %s131, 1
    %s133 = scalar_select %p130, %s131, %s132
    %p136 = pneg %p130
    %p137 = scmp.eq.s32.totalorder %s11, 1
    %p138 = por %p136, %p137
    %p139 = scmp.ne.s32.totalorder %s131, %s134
    %p140 = scmp.eq.s32.totalorder %s11, 0
    %p141 = por %p139, %p140
    %p142 = scmp.ne.s32.totalorder %s131, %s134
    %p143 = scmp.eq.s32.totalorder %s16, 1
    %p144 = por %p142, %p143
    %p145 = scmp.ne.s32.totalorder %s134, %s135
    %p146 = scmp.eq.s32.totalorder %s16, 0
    %p147 = por %p145, %p146
    %p148 = scmp.ne.s32.totalorder %s134, %s135
    %p149 = scmp.eq.s32.totalorder %s17, 1
    %p150 = por %p148, %p149
    %p152 = scmp.ne.s32.totalorder %s135, %s151
    %p153 = scmp.eq.s32.totalorder %s17, 0
    %p154 = por %p152, %p153
    %p155 = scmp.le.s32.totalorder 1, %s11
    %p156 = scmp.lt.s32.totalorder %s11, 3
    %p157 = pnand %p155, %p156
    %p158 = pneg %p157
    // Predicated region
    $region9: #{tpu_custom_call.1} parent=5 // pred_check
      _
    $region10: #{tpu_custom_call.1} parent=5 // pred_check_branch
      %160 = sbr.rel (%p157) target = $region12
    $region11: #{tpu_custom_call.1} parent=5 // pred_region
      %s161 = ssub.s32 %s11, 1
      // Predicated region
      $region13: #{tpu_custom_call.1} parent=11 // pred_check
        %p162 = pneg %p58
      $region14: #{tpu_custom_call.1} parent=11 // pred_check_branch
        %164 = sbr.rel (%p162) target = $region16
      $region15: #{tpu_custom_call.1} parent=11 // pred_region
        _
      $region16: #{tpu_custom_call.1} parent=11 // pred_fallthru
        _
      // Predicated region
      $region17: #{tpu_custom_call.1} parent=11 // pred_check
        %p165 = pneg %p79
      $region18: #{tpu_custom_call.1} parent=11 // pred_check_branch
        %167 = sbr.rel (%p165) target = $region20
      $region19: #{tpu_custom_call.1} parent=11 // pred_region
        _
      $region20: #{tpu_custom_call.1} parent=11 // pred_fallthru
        _
      // Predicated region
      $region21: #{tpu_custom_call.1} parent=11 // pred_check
        %p168 = pneg %p100
      $region22: #{tpu_custom_call.1} parent=11 // pred_check_branch
        %170 = sbr.rel (%p168) target = $region24
      $region23: #{tpu_custom_call.1} parent=11 // pred_region
        _
      $region24: #{tpu_custom_call.1} parent=11 // pred_fallthru
        _
      // Predicated region
      $region25: #{tpu_custom_call.1} parent=11 // pred_check
        %p171 = pneg %p121
      $region26: #{tpu_custom_call.1} parent=11 // pred_check_branch
        %173 = sbr.rel (%p171) target = $region28
      $region27: #{tpu_custom_call.1} parent=11 // pred_region
        _
      $region28: #{tpu_custom_call.1} parent=11 // pred_fallthru
        _
    $region12: #{tpu_custom_call.1} parent=5 // pred_fallthru
      _
    %p174 = scmp.lt.s32.totalorder %s11, 2
    // Predicated region
    $region29: #{tpu_custom_call.1} parent=5 // pred_check
      %p175 = pneg %p174
    $region30: #{tpu_custom_call.1} parent=5 // pred_check_branch
      %177 = sbr.rel (%p175) target = $region32
    $region31: #{tpu_custom_call.1} parent=5 // pred_region
      // Predicated region
      $region33: #{tpu_custom_call.1} parent=31 // pred_check
        %p178 = pneg %p31
      $region34: #{tpu_custom_call.1} parent=31 // pred_check_branch
        %180 = sbr.rel (%p178) target = $region36
      $region35: #{tpu_custom_call.1} parent=31 // pred_region
        %p181 = scmp.lt.s32.totalorder %s11, 1
        %s182 = scalar_select %p181, %s11, 1
        %s183 = smul.addr %s182, 32
        %s184 = smul.addr %s183, 8
        %s185 = scalar_lea.vmem %s0, %s184
      $region36: #{tpu_custom_call.1} parent=31 // pred_fallthru
        _
    $region32: #{tpu_custom_call.1} parent=5 // pred_fallthru
      _
    %p186 = scmp.le.s32.totalorder 1, %s11
    %p187 = scmp.lt.s32.totalorder %s11, 3
    %p188 = pnand %p186, %p187
    %p189 = pneg %p188
    // Predicated region
    $region37: #{tpu_custom_call.1} parent=5 // pred_check
      _
    $region38: #{tpu_custom_call.1} parent=5 // pred_check_branch
      %191 = sbr.rel (%p188) target = $region40
    $region39: #{tpu_custom_call.1} parent=5 // pred_region
      %s192 = ssub.s32 %s11, 1
      %p193 = scmp.lt.s32.totalorder %s16, 1
      %s194 = scalar_select %p193, %s16, 1
      %s195 = smul.addr %s194, 32
      %s196 = smul.addr %s195, 8
      %s197 = scalar_lea.vmem %s0, %s196
      %p198 = pneg %p37
      %p199 = pneg %p34
      %p200 = pneg %p58
      %p201 = pneg %p55
      %p202 = pneg %p79
      %p203 = pneg %p76
      %p204 = pneg %p100
      %p205 = pneg %p97
      %p206 = pneg %p121
      %p207 = pneg %p118
      %p208 = pneg %p147
      %p209 = pneg %p144
      %p210 = scmp.lt.s32.totalorder %s16, 1
      %s211 = scalar_select %p210, %s16, 1
      %s212 = smul.addr %s211, 32
      %s213 = smul.addr %s212, 8
      %s214 = scalar_lea.vmem %s5, %s213
      %p215 = scmp.lt.s32.totalorder %s16, 1
      %s216 = scalar_select %p215, %s16, 1
      %s217 = smul.addr %s216, 32
      %s218 = smul.addr %s217, 8
      %s219 = scalar_lea.vmem %s0, %s218
      %p220 = scmp.lt.s32.totalorder %s16, 1
      %s221 = scalar_select %p220, %s16, 1
      %s222 = smul.addr %s221, 32
      %s223 = smul.addr %s222, 8
      %s224 = scalar_lea.vmem %s5, %s223
      %v225 = vld [vmem:[%s219] sm:$0xff]
      %v226 = vld [vmem:[%s219 + $0x8] sm:$0xff]
      %v227 = vld [vmem:[%s219 + $0x10] sm:$0xff]
      %v228 = vld [vmem:[%s219 + $0x18] sm:$0xff]
      %v229 = vld [vmem:[%s219 + $0x20] sm:$0xff]
      %v230 = vld [vmem:[%s219 + $0x28] sm:$0xff]
      %v231 = vld [vmem:[%s219 + $0x30] sm:$0xff]
      %v232 = vld [vmem:[%s219 + $0x38] sm:$0xff]
      %v233 = vld [vmem:[%s219 + $0x40] sm:$0xff]
      %v234 = vld [vmem:[%s219 + $0x48] sm:$0xff]
      %v235 = vld [vmem:[%s219 + $0x50] sm:$0xff]
      %v236 = vld [vmem:[%s219 + $0x58] sm:$0xff]
      %v237 = vld [vmem:[%s219 + $0x60] sm:$0xff]
      %v238 = vld [vmem:[%s219 + $0x68] sm:$0xff]
      %v239 = vld [vmem:[%s219 + $0x70] sm:$0xff]
      %v240 = vld [vmem:[%s219 + $0x78] sm:$0xff]
      %v241 = vld [vmem:[%s219 + $0x80] sm:$0xff]
      %v242 = vld [vmem:[%s219 + $0x88] sm:$0xff]
      %v243 = vld [vmem:[%s219 + $0x90] sm:$0xff]
      %v244 = vld [vmem:[%s219 + $0x98] sm:$0xff]
      %v245 = vld [vmem:[%s219 + $0xa0] sm:$0xff]
      %v246 = vld [vmem:[%s219 + $0xa8] sm:$0xff]
      %v247 = vld [vmem:[%s219 + $0xb0] sm:$0xff]
      %v248 = vld [vmem:[%s219 + $0xb8] sm:$0xff]
      %v249 = vld [vmem:[%s219 + $0xc0] sm:$0xff]
      %v250 = vld [vmem:[%s219 + $0xc8] sm:$0xff]
      %v251 = vld [vmem:[%s219 + $0xd0] sm:$0xff]
      %v252 = vld [vmem:[%s219 + $0xd8] sm:$0xff]
      %v253 = vld [vmem:[%s219 + $0xe0] sm:$0xff]
      %v254 = vld [vmem:[%s219 + $0xe8] sm:$0xff]
      %v255 = vld [vmem:[%s219 + $0xf0] sm:$0xff]
      %v256 = vld [vmem:[%s219 + $0xf8] sm:$0xff]
      %vm289 = vcmask 1040384
      %v290 = vrot.slane %v225, 7
      %v291 = vrot.slane %v226, 7
      %v292 = vsel %vm289, %v290, %v291
      %v293 = vrot.slane %v227, 7
      %v294 = vrot.slane %v228, 7
      %v295 = vsel %vm289, %v293, %v294
      %v296 = vrot.slane %v229, 7
      %v297 = vrot.slane %v230, 7
      %v298 = vsel %vm289, %v296, %v297
      %v299 = vrot.slane %v231, 7
      %v300 = vrot.slane %v232, 7
      %v301 = vsel %vm289, %v299, %v300
      %v302 = vrot.slane %v233, 7
      %v303 = vrot.slane %v234, 7
      %v304 = vsel %vm289, %v302, %v303
      %v305 = vrot.slane %v235, 7
      %v306 = vrot.slane %v236, 7
      %v307 = vsel %vm289, %v305, %v306
      %v308 = vrot.slane %v237, 7
      %v309 = vrot.slane %v238, 7
      %v310 = vsel %vm289, %v308, %v309
      %v311 = vrot.slane %v239, 7
      %v312 = vrot.slane %v240, 7
      %v313 = vsel %vm289, %v311, %v312
      %v314 = vrot.slane %v241, 7
      %v315 = vrot.slane %v242, 7
      %v316 = vsel %vm289, %v314, %v315
      %v317 = vrot.slane %v243, 7
      %v318 = vrot.slane %v244, 7
      %v319 = vsel %vm289, %v317, %v318
      %v320 = vrot.slane %v245, 7
      %v321 = vrot.slane %v246, 7
      %v322 = vsel %vm289, %v320, %v321
      %v323 = vrot.slane %v247, 7
      %v324 = vrot.slane %v248, 7
      %v325 = vsel %vm289, %v323, %v324
      %v326 = vrot.slane %v249, 7
      %v327 = vrot.slane %v250, 7
      %v328 = vsel %vm289, %v326, %v327
      %v329 = vrot.slane %v251, 7
      %v330 = vrot.slane %v252, 7
      %v331 = vsel %vm289, %v329, %v330
      %v332 = vrot.slane %v253, 7
      %v333 = vrot.slane %v254, 7
      %v334 = vsel %vm289, %v332, %v333
      %v335 = vrot.slane %v255, 7
      %v336 = vrot.slane %v256, 7
      %v337 = vsel %vm289, %v335, %v336
      %v385 = vsel %vm289, 0.0, %v290
      %v386 = vsel %vm289, 0.0, %v293
      %v387 = vsel %vm289, 0.0, %v296
      %v388 = vsel %vm289, 0.0, %v299
      %v389 = vsel %vm289, 0.0, %v302
      %v390 = vsel %vm289, 0.0, %v305
      %v391 = vsel %vm289, 0.0, %v308
      %v392 = vsel %vm289, 0.0, %v311
      %v393 = vsel %vm289, 0.0, %v314
      %v394 = vsel %vm289, 0.0, %v317
      %v395 = vsel %vm289, 0.0, %v320
      %v396 = vsel %vm289, 0.0, %v323
      %v397 = vsel %vm289, 0.0, %v326
      %v398 = vsel %vm289, 0.0, %v329
      %v399 = vsel %vm289, 0.0, %v332
      %v400 = vsel %vm289, 0.0, %v335
      %v401 = vsel %vm289, %v291, 0.0
      %v402 = vsel %vm289, %v294, 0.0
      %v403 = vsel %vm289, %v297, 0.0
      %v404 = vsel %vm289, %v300, 0.0
      %v405 = vsel %vm289, %v303, 0.0
      %v406 = vsel %vm289, %v306, 0.0
      %v407 = vsel %vm289, %v309, 0.0
      %v408 = vsel %vm289, %v312, 0.0
      %v409 = vsel %vm289, %v315, 0.0
      %v410 = vsel %vm289, %v318, 0.0
      %v411 = vsel %vm289, %v321, 0.0
      %v412 = vsel %vm289, %v324, 0.0
      %v413 = vsel %vm289, %v327, 0.0
      %v414 = vsel %vm289, %v330, 0.0
      %v415 = vsel %vm289, %v333, 0.0
      %v416 = vsel %vm289, %v336, 0.0
      %vm448 = vcmask 1046528
      %v449 = vrot.slane 0.0, 1
      %v450 = vsel %vm448, %v449, %v449
      %v451 = vrot.slane %v385, 1
      %v452 = vrot.slane %v292, 1
      %v453 = vsel %vm448, %v451, %v452
      %v454 = vrot.slane %v401, 1
      %v455 = vsel %vm448, %v452, %v454
      %v456 = vrot.slane %v386, 1
      %v457 = vrot.slane %v295, 1
      %v458 = vsel %vm448, %v456, %v457
      %v459 = vrot.slane %v402, 1
      %v460 = vsel %vm448, %v457, %v459
      %v461 = vrot.slane %v387, 1
      %v462 = vrot.slane %v298, 1
      %v463 = vsel %vm448, %v461, %v462
      %v464 = vrot.slane %v403, 1
      %v465 = vsel %vm448, %v462, %v464
      %v466 = vrot.slane %v388, 1
      %v467 = vrot.slane %v301, 1
      %v468 = vsel %vm448, %v466, %v467
      %v469 = vrot.slane %v404, 1
      %v470 = vsel %vm448, %v467, %v469
      %v471 = vrot.slane %v389, 1
      %v472 = vrot.slane %v304, 1
      %v473 = vsel %vm448, %v471, %v472
      %v474 = vrot.slane %v405, 1
      %v475 = vsel %vm448, %v472, %v474
      %v476 = vrot.slane %v390, 1
      %v477 = vrot.slane %v307, 1
      %v478 = vsel %vm448, %v476, %v477
      %v479 = vrot.slane %v406, 1
      %v480 = vsel %vm448, %v477, %v479
      %v481 = vrot.slane %v391, 1
      %v482 = vrot.slane %v310, 1
      %v483 = vsel %vm448, %v481, %v482
      %v484 = vrot.slane %v407, 1
      %v485 = vsel %vm448, %v482, %v484
      %v486 = vrot.slane %v392, 1
      %v487 = vrot.slane %v313, 1
      %v488 = vsel %vm448, %v486, %v487
      %v489 = vrot.slane %v408, 1
      %v490 = vsel %vm448, %v487, %v489
      %v491 = vrot.slane %v393, 1
      %v492 = vrot.slane %v316, 1
      %v493 = vsel %vm448, %v491, %v492
      %v494 = vrot.slane %v409, 1
      %v495 = vsel %vm448, %v492, %v494
      %v496 = vrot.slane %v394, 1
      %v497 = vrot.slane %v319, 1
      %v498 = vsel %vm448, %v496, %v497
      %v499 = vrot.slane %v410, 1
      %v500 = vsel %vm448, %v497, %v499
      %v501 = vrot.slane %v395, 1
      %v502 = vrot.slane %v322, 1
      %v503 = vsel %vm448, %v501, %v502
      %v504 = vrot.slane %v411, 1
      %v505 = vsel %vm448, %v502, %v504
      %v506 = vrot.slane %v396, 1
      %v507 = vrot.slane %v325, 1
      %v508 = vsel %vm448, %v506, %v507
      %v509 = vrot.slane %v412, 1
      %v510 = vsel %vm448, %v507, %v509
      %v511 = vrot.slane %v397, 1
      %v512 = vrot.slane %v328, 1
      %v513 = vsel %vm448, %v511, %v512
      %v514 = vrot.slane %v413, 1
      %v515 = vsel %vm448, %v512, %v514
      %v516 = vrot.slane %v398, 1
      %v517 = vrot.slane %v331, 1
      %v518 = vsel %vm448, %v516, %v517
      %v519 = vrot.slane %v414, 1
      %v520 = vsel %vm448, %v517, %v519
      %v521 = vrot.slane %v399, 1
      %v522 = vrot.slane %v334, 1
      %v523 = vsel %vm448, %v521, %v522
      %v524 = vrot.slane %v415, 1
      %v525 = vsel %vm448, %v522, %v524
      %526 = vrot.lane.b32.xlu0 %v450, 4
      %v527 = vpop.permute.xlu0 %526
      %528 = vrot.lane.b32.xlu0 %v453, 4
      %v529 = vpop.permute.xlu0 %528
      %530 = vrot.lane.b32.xlu0 %v455, 4
      %v531 = vpop.permute.xlu0 %530
      %532 = vrot.lane.b32.xlu0 %v458, 4
      %v533 = vpop.permute.xlu0 %532
      %534 = vrot.lane.b32.xlu0 %v460, 4
      %v535 = vpop.permute.xlu0 %534
      %536 = vrot.lane.b32.xlu0 %v463, 4
      %v537 = vpop.permute.xlu0 %536
      %538 = vrot.lane.b32.xlu0 %v465, 4
      %v539 = vpop.permute.xlu0 %538
      %540 = vrot.lane.b32.xlu0 %v468, 4
      %v541 = vpop.permute.xlu0 %540
      %542 = vrot.lane.b32.xlu0 %v470, 4
      %v543 = vpop.permute.xlu0 %542
      %544 = vrot.lane.b32.xlu0 %v473, 4
      %v545 = vpop.permute.xlu0 %544
      %546 = vrot.lane.b32.xlu0 %v475, 4
      %v547 = vpop.permute.xlu0 %546
      %548 = vrot.lane.b32.xlu0 %v478, 4
      %v549 = vpop.permute.xlu0 %548
      %550 = vrot.lane.b32.xlu0 %v480, 4
      %v551 = vpop.permute.xlu0 %550
      %552 = vrot.lane.b32.xlu0 %v483, 4
      %v553 = vpop.permute.xlu0 %552
      %554 = vrot.lane.b32.xlu0 %v485, 4
      %v555 = vpop.permute.xlu0 %554
      %556 = vrot.lane.b32.xlu0 %v488, 4
      %v557 = vpop.permute.xlu0 %556
      %558 = vrot.lane.b32.xlu0 %v490, 4
      %v559 = vpop.permute.xlu0 %558
      %560 = vrot.lane.b32.xlu0 %v493, 4
      %v561 = vpop.permute.xlu0 %560
      %562 = vrot.lane.b32.xlu0 %v495, 4
      %v563 = vpop.permute.xlu0 %562
      %564 = vrot.lane.b32.xlu0 %v498, 4
      %v565 = vpop.permute.xlu0 %564
      %566 = vrot.lane.b32.xlu0 %v500, 4
      %v567 = vpop.permute.xlu0 %566
      %568 = vrot.lane.b32.xlu0 %v503, 4
      %v569 = vpop.permute.xlu0 %568
      %570 = vrot.lane.b32.xlu0 %v505, 4
      %v571 = vpop.permute.xlu0 %570
      %572 = vrot.lane.b32.xlu0 %v508, 4
      %v573 = vpop.permute.xlu0 %572
      %574 = vrot.lane.b32.xlu0 %v510, 4
      %v575 = vpop.permute.xlu0 %574
      %576 = vrot.lane.b32.xlu0 %v513, 4
      %v577 = vpop.permute.xlu0 %576
      %578 = vrot.lane.b32.xlu0 %v515, 4
      %v579 = vpop.permute.xlu0 %578
      %580 = vrot.lane.b32.xlu0 %v518, 4
      %v581 = vpop.permute.xlu0 %580
      %582 = vrot.lane.b32.xlu0 %v520, 4
      %v583 = vpop.permute.xlu0 %582
      %584 = vrot.lane.b32.xlu0 %v523, 4
      %v585 = vpop.permute.xlu0 %584
      %586 = vrot.lane.b32.xlu0 %v525, 4
      %v587 = vpop.permute.xlu0 %586
      %vm619 = vcmask 1045504
      %v620 = vrot.slane 0.0, 2
      %v621 = vsel %vm619, %v620, %v620
      %v622 = vrot.slane %v385, 2
      %v623 = vrot.slane %v292, 2
      %v624 = vsel %vm619, %v622, %v623
      %v625 = vrot.slane %v401, 2
      %v626 = vsel %vm619, %v623, %v625
      %v627 = vrot.slane %v386, 2
      %v628 = vrot.slane %v295, 2
      %v629 = vsel %vm619, %v627, %v628
      %v630 = vrot.slane %v402, 2
      %v631 = vsel %vm619, %v628, %v630
      %v632 = vrot.slane %v387, 2
      %v633 = vrot.slane %v298, 2
      %v634 = vsel %vm619, %v632, %v633
      %v635 = vrot.slane %v403, 2
      %v636 = vsel %vm619, %v633, %v635
      %v637 = vrot.slane %v388, 2
      %v638 = vrot.slane %v301, 2
      %v639 = vsel %vm619, %v637, %v638
      %v640 = vrot.slane %v404, 2
      %v641 = vsel %vm619, %v638, %v640
      %v642 = vrot.slane %v389, 2
      %v643 = vrot.slane %v304, 2
      %v644 = vsel %vm619, %v642, %v643
      %v645 = vrot.slane %v405, 2
      %v646 = vsel %vm619, %v643, %v645
      %v647 = vrot.slane %v390, 2
      %v648 = vrot.slane %v307, 2
      %v649 = vsel %vm619, %v647, %v648
      %v650 = vrot.slane %v406, 2
      %v651 = vsel %vm619, %v648, %v650
      %v652 = vrot.slane %v391, 2
      %v653 = vrot.slane %v310, 2
      %v654 = vsel %vm619, %v652, %v653
      %v655 = vrot.slane %v407, 2
      %v656 = vsel %vm619, %v653, %v655
      %v657 = vrot.slane %v392, 2
      %v658 = vrot.slane %v313, 2
      %v659 = vsel %vm619, %v657, %v658
      %v660 = vrot.slane %v408, 2
      %v661 = vsel %vm619, %v658, %v660
      %v662 = vrot.slane %v393, 2
      %v663 = vrot.slane %v316, 2
      %v664 = vsel %vm619, %v662, %v663
      %v665 = vrot.slane %v409, 2
      %v666 = vsel %vm619, %v663, %v665
      %v667 = vrot.slane %v394, 2
      %v668 = vrot.slane %v319, 2
      %v669 = vsel %vm619, %v667, %v668
      %v670 = vrot.slane %v410, 2
      %v671 = vsel %vm619, %v668, %v670
      %v672 = vrot.slane %v395, 2
      %v673 = vrot.slane %v322, 2
      %v674 = vsel %vm619, %v672, %v673
      %v675 = vrot.slane %v411, 2
      %v676 = vsel %vm619, %v673, %v675
      %v677 = vrot.slane %v396, 2
      %v678 = vrot.slane %v325, 2
      %v679 = vsel %vm619, %v677, %v678
      %v680 = vrot.slane %v412, 2
      %v681 = vsel %vm619, %v678, %v680
      %v682 = vrot.slane %v397, 2
      %v683 = vrot.slane %v328, 2
      %v684 = vsel %vm619, %v682, %v683
      %v685 = vrot.slane %v413, 2
      %v686 = vsel %vm619, %v683, %v685
      %v687 = vrot.slane %v398, 2
      %v688 = vrot.slane %v331, 2
      %v689 = vsel %vm619, %v687, %v688
      %v690 = vrot.slane %v414, 2
      %v691 = vsel %vm619, %v688, %v690
      %v692 = vrot.slane %v399, 2
      %v693 = vrot.slane %v334, 2
      %v694 = vsel %vm619, %v692, %v693
      %v695 = vrot.slane %v415, 2
      %v696 = vsel %vm619, %v693, %v695
      %697 = vrot.lane.b32.xlu0 %v621, 8
      %v698 = vpop.permute.xlu0 %697
      %699 = vrot.lane.b32.xlu0 %v624, 8
      %v700 = vpop.permute.xlu0 %699
      %701 = vrot.lane.b32.xlu0 %v626, 8
      %v702 = vpop.permute.xlu0 %701
      %703 = vrot.lane.b32.xlu0 %v629, 8
      %v704 = vpop.permute.xlu0 %703
      %705 = vrot.lane.b32.xlu0 %v631, 8
      %v706 = vpop.permute.xlu0 %705
      %707 = vrot.lane.b32.xlu0 %v634, 8
      %v708 = vpop.permute.xlu0 %707
      %709 = vrot.lane.b32.xlu0 %v636, 8
      %v710 = vpop.permute.xlu0 %709
      %711 = vrot.lane.b32.xlu0 %v639, 8
      %v712 = vpop.permute.xlu0 %711
      %713 = vrot.lane.b32.xlu0 %v641, 8
      %v714 = vpop.permute.xlu0 %713
      %715 = vrot.lane.b32.xlu0 %v644, 8
      %v716 = vpop.permute.xlu0 %715
      %717 = vrot.lane.b32.xlu0 %v646, 8
      %v718 = vpop.permute.xlu0 %717
      %719 = vrot.lane.b32.xlu0 %v649, 8
      %v720 = vpop.permute.xlu0 %719
      %721 = vrot.lane.b32.xlu0 %v651, 8
      %v722 = vpop.permute.xlu0 %721
      %723 = vrot.lane.b32.xlu0 %v654, 8
      %v724 = vpop.permute.xlu0 %723
      %725 = vrot.lane.b32.xlu0 %v656, 8
      %v726 = vpop.permute.xlu0 %725
      %727 = vrot.lane.b32.xlu0 %v659, 8
      %v728 = vpop.permute.xlu0 %727
      %729 = vrot.lane.b32.xlu0 %v661, 8
      %v730 = vpop.permute.xlu0 %729
      %731 = vrot.lane.b32.xlu0 %v664, 8
      %v732 = vpop.permute.xlu0 %731
      %733 = vrot.lane.b32.xlu0 %v666, 8
      %v734 = vpop.permute.xlu0 %733
      %735 = vrot.lane.b32.xlu0 %v669, 8
      %v736 = vpop.permute.xlu0 %735
      %737 = vrot.lane.b32.xlu0 %v671, 8
      %v738 = vpop.permute.xlu0 %737
      %739 = vrot.lane.b32.xlu0 %v674, 8
      %v740 = vpop.permute.xlu0 %739
      %741 = vrot.lane.b32.xlu0 %v676, 8
      %v742 = vpop.permute.xlu0 %741
      %743 = vrot.lane.b32.xlu0 %v679, 8
      %v744 = vpop.permute.xlu0 %743
      %745 = vrot.lane.b32.xlu0 %v681, 8
      %v746 = vpop.permute.xlu0 %745
      %747 = vrot.lane.b32.xlu0 %v684, 8
      %v748 = vpop.permute.xlu0 %747
      %749 = vrot.lane.b32.xlu0 %v686, 8
      %v750 = vpop.permute.xlu0 %749
      %751 = vrot.lane.b32.xlu0 %v689, 8
      %v752 = vpop.permute.xlu0 %751
      %753 = vrot.lane.b32.xlu0 %v691, 8
      %v754 = vpop.permute.xlu0 %753
      %755 = vrot.lane.b32.xlu0 %v694, 8
      %v756 = vpop.permute.xlu0 %755
      %757 = vrot.lane.b32.xlu0 %v696, 8
      %v758 = vpop.permute.xlu0 %757
      %791 = vrot.lane.b32.xlu0 %v385, 12
      %v792 = vpop.permute.xlu0 %791
      %793 = vrot.lane.b32.xlu0 %v292, 12
      %v794 = vpop.permute.xlu0 %793
      %795 = vrot.lane.b32.xlu0 %v386, 12
      %v796 = vpop.permute.xlu0 %795
      %797 = vrot.lane.b32.xlu0 %v295, 12
      %v798 = vpop.permute.xlu0 %797
      %799 = vrot.lane.b32.xlu0 %v387, 12
      %v800 = vpop.permute.xlu0 %799
      %801 = vrot.lane.b32.xlu0 %v298, 12
      %v802 = vpop.permute.xlu0 %801
      %803 = vrot.lane.b32.xlu0 %v388, 12
      %v804 = vpop.permute.xlu0 %803
      %805 = vrot.lane.b32.xlu0 %v301, 12
      %v806 = vpop.permute.xlu0 %805
      %807 = vrot.lane.b32.xlu0 %v389, 12
      %v808 = vpop.permute.xlu0 %807
      %809 = vrot.lane.b32.xlu0 %v304, 12
      %v810 = vpop.permute.xlu0 %809
      %811 = vrot.lane.b32.xlu0 %v390, 12
      %v812 = vpop.permute.xlu0 %811
      %813 = vrot.lane.b32.xlu0 %v307, 12
      %v814 = vpop.permute.xlu0 %813
      %815 = vrot.lane.b32.xlu0 %v391, 12
      %v816 = vpop.permute.xlu0 %815
      %817 = vrot.lane.b32.xlu0 %v310, 12
      %v818 = vpop.permute.xlu0 %817
      %819 = vrot.lane.b32.xlu0 %v392, 12
      %v820 = vpop.permute.xlu0 %819
      %821 = vrot.lane.b32.xlu0 %v313, 12
      %v822 = vpop.permute.xlu0 %821
      %823 = vrot.lane.b32.xlu0 %v393, 12
      %v824 = vpop.permute.xlu0 %823
      %825 = vrot.lane.b32.xlu0 %v316, 12
      %v826 = vpop.permute.xlu0 %825
      %827 = vrot.lane.b32.xlu0 %v394, 12
      %v828 = vpop.permute.xlu0 %827
      %829 = vrot.lane.b32.xlu0 %v319, 12
      %v830 = vpop.permute.xlu0 %829
      %831 = vrot.lane.b32.xlu0 %v395, 12
      %v832 = vpop.permute.xlu0 %831
      %833 = vrot.lane.b32.xlu0 %v322, 12
      %v834 = vpop.permute.xlu0 %833
      %835 = vrot.lane.b32.xlu0 %v396, 12
      %v836 = vpop.permute.xlu0 %835
      %837 = vrot.lane.b32.xlu0 %v325, 12
      %v838 = vpop.permute.xlu0 %837
      %839 = vrot.lane.b32.xlu0 %v397, 12
      %v840 = vpop.permute.xlu0 %839
      %841 = vrot.lane.b32.xlu0 %v328, 12
      %v842 = vpop.permute.xlu0 %841
      %843 = vrot.lane.b32.xlu0 %v398, 12
      %v844 = vpop.permute.xlu0 %843
      %845 = vrot.lane.b32.xlu0 %v331, 12
      %v846 = vpop.permute.xlu0 %845
      %847 = vrot.lane.b32.xlu0 %v399, 12
      %v848 = vpop.permute.xlu0 %847
      %849 = vrot.lane.b32.xlu0 %v334, 12
      %v850 = vpop.permute.xlu0 %849
      %851 = vrot.lane.b32.xlu0 %v400, 12
      %v852 = vpop.permute.xlu0 %851
      %853 = vrot.lane.b32.xlu0 %v337, 12
      %v854 = vpop.permute.xlu0 %853
      %v888 = vrot.slane %v400, 1
      %v889 = vrot.slane %v337, 1
      %v890 = vsel %vm448, %v888, %v889
      %v891 = vrot.slane %v416, 1
      %v892 = vsel %vm448, %v889, %v891
      %893 = vrot.lane.b32.xlu0 %v453, 16
      %v894 = vpop.permute.xlu0 %893
      %895 = vrot.lane.b32.xlu0 %v455, 16
      %v896 = vpop.permute.xlu0 %895
      %897 = vrot.lane.b32.xlu0 %v458, 16
      %v898 = vpop.permute.xlu0 %897
      %899 = vrot.lane.b32.xlu0 %v460, 16
      %v900 = vpop.permute.xlu0 %899
      %901 = vrot.lane.b32.xlu0 %v463, 16
      %v902 = vpop.permute.xlu0 %901
      %903 = vrot.lane.b32.xlu0 %v465, 16
      %v904 = vpop.permute.xlu0 %903
      %905 = vrot.lane.b32.xlu0 %v468, 16
      %v906 = vpop.permute.xlu0 %905
      %907 = vrot.lane.b32.xlu0 %v470, 16
      %v908 = vpop.permute.xlu0 %907
      %909 = vrot.lane.b32.xlu0 %v473, 16
      %v910 = vpop.permute.xlu0 %909
      %911 = vrot.lane.b32.xlu0 %v475, 16
      %v912 = vpop.permute.xlu0 %911
      %913 = vrot.lane.b32.xlu0 %v478, 16
      %v914 = vpop.permute.xlu0 %913
      %915 = vrot.lane.b32.xlu0 %v480, 16
      %v916 = vpop.permute.xlu0 %915
      %917 = vrot.lane.b32.xlu0 %v483, 16
      %v918 = vpop.permute.xlu0 %917
      %919 = vrot.lane.b32.xlu0 %v485, 16
      %v920 = vpop.permute.xlu0 %919
      %921 = vrot.lane.b32.xlu0 %v488, 16
      %v922 = vpop.permute.xlu0 %921
      %923 = vrot.lane.b32.xlu0 %v490, 16
      %v924 = vpop.permute.xlu0 %923
      %925 = vrot.lane.b32.xlu0 %v493, 16
      %v926 = vpop.permute.xlu0 %925
      %927 = vrot.lane.b32.xlu0 %v495, 16
      %v928 = vpop.permute.xlu0 %927
      %929 = vrot.lane.b32.xlu0 %v498, 16
      %v930 = vpop.permute.xlu0 %929
      %931 = vrot.lane.b32.xlu0 %v500, 16
      %v932 = vpop.permute.xlu0 %931
      %933 = vrot.lane.b32.xlu0 %v503, 16
      %v934 = vpop.permute.xlu0 %933
      %935 = vrot.lane.b32.xlu0 %v505, 16
      %v936 = vpop.permute.xlu0 %935
      %937 = vrot.lane.b32.xlu0 %v508, 16
      %v938 = vpop.permute.xlu0 %937
      %939 = vrot.lane.b32.xlu0 %v510, 16
      %v940 = vpop.permute.xlu0 %939
      %941 = vrot.lane.b32.xlu0 %v513, 16
      %v942 = vpop.permute.xlu0 %941
      %943 = vrot.lane.b32.xlu0 %v515, 16
      %v944 = vpop.permute.xlu0 %943
      %945 = vrot.lane.b32.xlu0 %v518, 16
      %v946 = vpop.permute.xlu0 %945
      %947 = vrot.lane.b32.xlu0 %v520, 16
      %v948 = vpop.permute.xlu0 %947
      %949 = vrot.lane.b32.xlu0 %v523, 16
      %v950 = vpop.permute.xlu0 %949
      %951 = vrot.lane.b32.xlu0 %v525, 16
      %v952 = vpop.permute.xlu0 %951
      %953 = vrot.lane.b32.xlu0 %v890, 16
      %v954 = vpop.permute.xlu0 %953
      %955 = vrot.lane.b32.xlu0 %v892, 16
      %v956 = vpop.permute.xlu0 %955
      %v989 = vrot.slane %v400, 2
      %v990 = vrot.slane %v337, 2
      %v991 = vsel %vm619, %v989, %v990
      %v992 = vrot.slane %v416, 2
      %v993 = vsel %vm619, %v990, %v992
      %994 = vrot.lane.b32.xlu0 %v624, 20
      %v995 = vpop.permute.xlu0 %994
      %996 = vrot.lane.b32.xlu0 %v626, 20
      %v997 = vpop.permute.xlu0 %996
      %998 = vrot.lane.b32.xlu0 %v629, 20
      %v999 = vpop.permute.xlu0 %998
      %1000 = vrot.lane.b32.xlu0 %v631, 20
      %v1001 = vpop.permute.xlu0 %1000
      %1002 = vrot.lane.b32.xlu0 %v634, 20
      %v1003 = vpop.permute.xlu0 %1002
      %1004 = vrot.lane.b32.xlu0 %v636, 20
      %v1005 = vpop.permute.xlu0 %1004
      %1006 = vrot.lane.b32.xlu0 %v639, 20
      %v1007 = vpop.permute.xlu0 %1006
      %1008 = vrot.lane.b32.xlu0 %v641, 20
      %v1009 = vpop.permute.xlu0 %1008
      %1010 = vrot.lane.b32.xlu0 %v644, 20
      %v1011 = vpop.permute.xlu0 %1010
      %1012 = vrot.lane.b32.xlu0 %v646, 20
      %v1013 = vpop.permute.xlu0 %1012
      %1014 = vrot.lane.b32.xlu0 %v649, 20
      %v1015 = vpop.permute.xlu0 %1014
      %1016 = vrot.lane.b32.xlu0 %v651, 20
      %v1017 = vpop.permute.xlu0 %1016
      %1018 = vrot.lane.b32.xlu0 %v654, 20
      %v1019 = vpop.permute.xlu0 %1018
      %1020 = vrot.lane.b32.xlu0 %v656, 20
      %v1021 = vpop.permute.xlu0 %1020
      %1022 = vrot.lane.b32.xlu0 %v659, 20
      %v1023 = vpop.permute.xlu0 %1022
      %1024 = vrot.lane.b32.xlu0 %v661, 20
      %v1025 = vpop.permute.xlu0 %1024
      %1026 = vrot.lane.b32.xlu0 %v664, 20
      %v1027 = vpop.permute.xlu0 %1026
      %1028 = vrot.lane.b32.xlu0 %v666, 20
      %v1029 = vpop.permute.xlu0 %1028
      %1030 = vrot.lane.b32.xlu0 %v669, 20
      %v1031 = vpop.permute.xlu0 %1030
      %1032 = vrot.lane.b32.xlu0 %v671, 20
      %v1033 = vpop.permute.xlu0 %1032
      %1034 = vrot.lane.b32.xlu0 %v674, 20
      %v1035 = vpop.permute.xlu0 %1034
      %1036 = vrot.lane.b32.xlu0 %v676, 20
      %v1037 = vpop.permute.xlu0 %1036
      %1038 = vrot.lane.b32.xlu0 %v679, 20
      %v1039 = vpop.permute.xlu0 %1038
      %1040 = vrot.lane.b32.xlu0 %v681, 20
      %v1041 = vpop.permute.xlu0 %1040
      %1042 = vrot.lane.b32.xlu0 %v684, 20
      %v1043 = vpop.permute.xlu0 %1042
      %1044 = vrot.lane.b32.xlu0 %v686, 20
      %v1045 = vpop.permute.xlu0 %1044
      %1046 = vrot.lane.b32.xlu0 %v689, 20
      %v1047 = vpop.permute.xlu0 %1046
      %1048 = vrot.lane.b32.xlu0 %v691, 20
      %v1049 = vpop.permute.xlu0 %1048
      %1050 = vrot.lane.b32.xlu0 %v694, 20
      %v1051 = vpop.permute.xlu0 %1050
      %1052 = vrot.lane.b32.xlu0 %v696, 20
      %v1053 = vpop.permute.xlu0 %1052
      %1054 = vrot.lane.b32.xlu0 %v991, 20
      %v1055 = vpop.permute.xlu0 %1054
      %1056 = vrot.lane.b32.xlu0 %v993, 20
      %v1057 = vpop.permute.xlu0 %1056
      %1090 = vrot.lane.b32.xlu0 %v386, 24
      %v1091 = vpop.permute.xlu0 %1090
      %1092 = vrot.lane.b32.xlu0 %v295, 24
      %v1093 = vpop.permute.xlu0 %1092
      %1094 = vrot.lane.b32.xlu0 %v387, 24
      %v1095 = vpop.permute.xlu0 %1094
      %1096 = vrot.lane.b32.xlu0 %v298, 24
      %v1097 = vpop.permute.xlu0 %1096
      %1098 = vrot.lane.b32.xlu0 %v388, 24
      %v1099 = vpop.permute.xlu0 %1098
      %1100 = vrot.lane.b32.xlu0 %v301, 24
      %v1101 = vpop.permute.xlu0 %1100
      %1102 = vrot.lane.b32.xlu0 %v389, 24
      %v1103 = vpop.permute.xlu0 %1102
      %1104 = vrot.lane.b32.xlu0 %v304, 24
      %v1105 = vpop.permute.xlu0 %1104
      %1106 = vrot.lane.b32.xlu0 %v390, 24
      %v1107 = vpop.permute.xlu0 %1106
      %1108 = vrot.lane.b32.xlu0 %v307, 24
      %v1109 = vpop.permute.xlu0 %1108
      %1110 = vrot.lane.b32.xlu0 %v391, 24
      %v1111 = vpop.permute.xlu0 %1110
      %1112 = vrot.lane.b32.xlu0 %v310, 24
      %v1113 = vpop.permute.xlu0 %1112
      %1114 = vrot.lane.b32.xlu0 %v392, 24
      %v1115 = vpop.permute.xlu0 %1114
      %1116 = vrot.lane.b32.xlu0 %v313, 24
      %v1117 = vpop.permute.xlu0 %1116
      %1118 = vrot.lane.b32.xlu0 %v393, 24
      %v1119 = vpop.permute.xlu0 %1118
      %1120 = vrot.lane.b32.xlu0 %v316, 24
      %v1121 = vpop.permute.xlu0 %1120
      %1122 = vrot.lane.b32.xlu0 %v394, 24
      %v1123 = vpop.permute.xlu0 %1122
      %1124 = vrot.lane.b32.xlu0 %v319, 24
      %v1125 = vpop.permute.xlu0 %1124
      %1126 = vrot.lane.b32.xlu0 %v395, 24
      %v1127 = vpop.permute.xlu0 %1126
      %1128 = vrot.lane.b32.xlu0 %v322, 24
      %v1129 = vpop.permute.xlu0 %1128
      %1130 = vrot.lane.b32.xlu0 %v396, 24
      %v1131 = vpop.permute.xlu0 %1130
      %1132 = vrot.lane.b32.xlu0 %v325, 24
      %v1133 = vpop.permute.xlu0 %1132
      %1134 = vrot.lane.b32.xlu0 %v397, 24
      %v1135 = vpop.permute.xlu0 %1134
      %1136 = vrot.lane.b32.xlu0 %v328, 24
      %v1137 = vpop.permute.xlu0 %1136
      %1138 = vrot.lane.b32.xlu0 %v398, 24
      %v1139 = vpop.permute.xlu0 %1138
      %1140 = vrot.lane.b32.xlu0 %v331, 24
      %v1141 = vpop.permute.xlu0 %1140
      %1142 = vrot.lane.b32.xlu0 %v399, 24
      %v1143 = vpop.permute.xlu0 %1142
      %1144 = vrot.lane.b32.xlu0 %v334, 24
      %v1145 = vpop.permute.xlu0 %1144
      %1146 = vrot.lane.b32.xlu0 %v400, 24
      %v1147 = vpop.permute.xlu0 %1146
      %1148 = vrot.lane.b32.xlu0 %v337, 24
      %v1149 = vpop.permute.xlu0 %1148
      %1150 = vrot.lane.b32.xlu0 0.0, 24
      %v1151 = vpop.permute.xlu0 %1150
      %1183 = vrot.lane.b32.xlu0 %v458, 28
      %v1184 = vpop.permute.xlu0 %1183
      %1185 = vrot.lane.b32.xlu0 %v460, 28
      %v1186 = vpop.permute.xlu0 %1185
      %1187 = vrot.lane.b32.xlu0 %v463, 28
      %v1188 = vpop.permute.xlu0 %1187
      %1189 = vrot.lane.b32.xlu0 %v465, 28
      %v1190 = vpop.permute.xlu0 %1189
      %1191 = vrot.lane.b32.xlu0 %v468, 28
      %v1192 = vpop.permute.xlu0 %1191
      %1193 = vrot.lane.b32.xlu0 %v470, 28
      %v1194 = vpop.permute.xlu0 %1193
      %1195 = vrot.lane.b32.xlu0 %v473, 28
      %v1196 = vpop.permute.xlu0 %1195
      %1197 = vrot.lane.b32.xlu0 %v475, 28
      %v1198 = vpop.permute.xlu0 %1197
      %1199 = vrot.lane.b32.xlu0 %v478, 28
      %v1200 = vpop.permute.xlu0 %1199
      %1201 = vrot.lane.b32.xlu0 %v480, 28
      %v1202 = vpop.permute.xlu0 %1201
      %1203 = vrot.lane.b32.xlu0 %v483, 28
      %v1204 = vpop.permute.xlu0 %1203
      %1205 = vrot.lane.b32.xlu0 %v485, 28
      %v1206 = vpop.permute.xlu0 %1205
      %1207 = vrot.lane.b32.xlu0 %v488, 28
      %v1208 = vpop.permute.xlu0 %1207
      %1209 = vrot.lane.b32.xlu0 %v490, 28
      %v1210 = vpop.permute.xlu0 %1209
      %1211 = vrot.lane.b32.xlu0 %v493, 28
      %v1212 = vpop.permute.xlu0 %1211
      %1213 = vrot.lane.b32.xlu0 %v495, 28
      %v1214 = vpop.permute.xlu0 %1213
      %1215 = vrot.lane.b32.xlu0 %v498, 28
      %v1216 = vpop.permute.xlu0 %1215
      %1217 = vrot.lane.b32.xlu0 %v500, 28
      %v1218 = vpop.permute.xlu0 %1217
      %1219 = vrot.lane.b32.xlu0 %v503, 28
      %v1220 = vpop.permute.xlu0 %1219
      %1221 = vrot.lane.b32.xlu0 %v505, 28
      %v1222 = vpop.permute.xlu0 %1221
      %1223 = vrot.lane.b32.xlu0 %v508, 28
      %v1224 = vpop.permute.xlu0 %1223
      %1225 = vrot.lane.b32.xlu0 %v510, 28
      %v1226 = vpop.permute.xlu0 %1225
      %1227 = vrot.lane.b32.xlu0 %v513, 28
      %v1228 = vpop.permute.xlu0 %1227
      %1229 = vrot.lane.b32.xlu0 %v515, 28
      %v1230 = vpop.permute.xlu0 %1229
      %1231 = vrot.lane.b32.xlu0 %v518, 28
      %v1232 = vpop.permute.xlu0 %1231
      %1233 = vrot.lane.b32.xlu0 %v520, 28
      %v1234 = vpop.permute.xlu0 %1233
      %1235 = vrot.lane.b32.xlu0 %v523, 28
      %v1236 = vpop.permute.xlu0 %1235
      %1237 = vrot.lane.b32.xlu0 %v525, 28
      %v1238 = vpop.permute.xlu0 %1237
      %1239 = vrot.lane.b32.xlu0 %v890, 28
      %v1240 = vpop.permute.xlu0 %1239
      %1241 = vrot.lane.b32.xlu0 %v892, 28
      %v1242 = vpop.permute.xlu0 %1241
      %1243 = vrot.lane.b32.xlu0 %v450, 28
      %v1244 = vpop.permute.xlu0 %1243
      %1276 = vrot.lane.b32.xlu0 %v629, 32
      %v1277 = vpop.permute.xlu0 %1276
      %1278 = vrot.lane.b32.xlu0 %v631, 32
      %v1279 = vpop.permute.xlu0 %1278
      %1280 = vrot.lane.b32.xlu0 %v634, 32
      %v1281 = vpop.permute.xlu0 %1280
      %1282 = vrot.lane.b32.xlu0 %v636, 32
      %v1283 = vpop.permute.xlu0 %1282
      %1284 = vrot.lane.b32.xlu0 %v639, 32
      %v1285 = vpop.permute.xlu0 %1284
      %1286 = vrot.lane.b32.xlu0 %v641, 32
      %v1287 = vpop.permute.xlu0 %1286
      %1288 = vrot.lane.b32.xlu0 %v644, 32
      %v1289 = vpop.permute.xlu0 %1288
      %1290 = vrot.lane.b32.xlu0 %v646, 32
      %v1291 = vpop.permute.xlu0 %1290
      %1292 = vrot.lane.b32.xlu0 %v649, 32
      %v1293 = vpop.permute.xlu0 %1292
      %1294 = vrot.lane.b32.xlu0 %v651, 32
      %v1295 = vpop.permute.xlu0 %1294
      %1296 = vrot.lane.b32.xlu0 %v654, 32
      %v1297 = vpop.permute.xlu0 %1296
      %1298 = vrot.lane.b32.xlu0 %v656, 32
      %v1299 = vpop.permute.xlu0 %1298
      %1300 = vrot.lane.b32.xlu0 %v659, 32
      %v1301 = vpop.permute.xlu0 %1300
      %1302 = vrot.lane.b32.xlu0 %v661, 32
      %v1303 = vpop.permute.xlu0 %1302
      %1304 = vrot.lane.b32.xlu0 %v664, 32
      %v1305 = vpop.permute.xlu0 %1304
      %1306 = vrot.lane.b32.xlu0 %v666, 32
      %v1307 = vpop.permute.xlu0 %1306
      %1308 = vrot.lane.b32.xlu0 %v669, 32
      %v1309 = vpop.permute.xlu0 %1308
      %1310 = vrot.lane.b32.xlu0 %v671, 32
      %v1311 = vpop.permute.xlu0 %1310
      %1312 = vrot.lane.b32.xlu0 %v674, 32
      %v1313 = vpop.permute.xlu0 %1312
      %1314 = vrot.lane.b32.xlu0 %v676, 32
      %v1315 = vpop.permute.xlu0 %1314
      %1316 = vrot.lane.b32.xlu0 %v679, 32
      %v1317 = vpop.permute.xlu0 %1316
      %1318 = vrot.lane.b32.xlu0 %v681, 32
      %v1319 = vpop.permute.xlu0 %1318
      %1320 = vrot.lane.b32.xlu0 %v684, 32
      %v1321 = vpop.permute.xlu0 %1320
      %1322 = vrot.lane.b32.xlu0 %v686, 32
      %v1323 = vpop.permute.xlu0 %1322
      %1324 = vrot.lane.b32.xlu0 %v689, 32
      %v1325 = vpop.permute.xlu0 %1324
      %1326 = vrot.lane.b32.xlu0 %v691, 32
      %v1327 = vpop.permute.xlu0 %1326
      %1328 = vrot.lane.b32.xlu0 %v694, 32
      %v1329 = vpop.permute.xlu0 %1328
      %1330 = vrot.lane.b32.xlu0 %v696, 32
      %v1331 = vpop.permute.xlu0 %1330
      %1332 = vrot.lane.b32.xlu0 %v991, 32
      %v1333 = vpop.permute.xlu0 %1332
      %1334 = vrot.lane.b32.xlu0 %v993, 32
      %v1335 = vpop.permute.xlu0 %1334
      %1336 = vrot.lane.b32.xlu0 %v621, 32
      %v1337 = vpop.permute.xlu0 %1336
      %vm1369 = vcmask 31744
      %v1370 = vsel %vm1369, 0.0, %v527
      %v1371 = vsel %vm1369, %v385, %v529
      %v1372 = vsel %vm1369, %v292, %v531
      %v1373 = vsel %vm1369, %v386, %v533
      %v1374 = vsel %vm1369, %v295, %v535
      %v1375 = vsel %vm1369, %v387, %v537
      %v1376 = vsel %vm1369, %v298, %v539
      %v1377 = vsel %vm1369, %v388, %v541
      %v1378 = vsel %vm1369, %v301, %v543
      %v1379 = vsel %vm1369, %v389, %v545
      %v1380 = vsel %vm1369, %v304, %v547
      %v1381 = vsel %vm1369, %v390, %v549
      %v1382 = vsel %vm1369, %v307, %v551
      %v1383 = vsel %vm1369, %v391, %v553
      %v1384 = vsel %vm1369, %v310, %v555
      %v1385 = vsel %vm1369, %v392, %v557
      %v1386 = vsel %vm1369, %v313, %v559
      %v1387 = vsel %vm1369, %v393, %v561
      %v1388 = vsel %vm1369, %v316, %v563
      %v1389 = vsel %vm1369, %v394, %v565
      %v1390 = vsel %vm1369, %v319, %v567
      %v1391 = vsel %vm1369, %v395, %v569
      %v1392 = vsel %vm1369, %v322, %v571
      %v1393 = vsel %vm1369, %v396, %v573
      %v1394 = vsel %vm1369, %v325, %v575
      %v1395 = vsel %vm1369, %v397, %v577
      %v1396 = vsel %vm1369, %v328, %v579
      %v1397 = vsel %vm1369, %v398, %v581
      %v1398 = vsel %vm1369, %v331, %v583
      %v1399 = vsel %vm1369, %v399, %v585
      %v1400 = vsel %vm1369, %v334, %v587
      %vm1401 = vcmask 64512
      %v1402 = vsel %vm1401, %v1370, %v698
      %v1403 = vsel %vm1401, %v1371, %v700
      %v1404 = vsel %vm1401, %v1372, %v702
      %v1405 = vsel %vm1401, %v1373, %v704
      %v1406 = vsel %vm1401, %v1374, %v706
      %v1407 = vsel %vm1401, %v1375, %v708
      %v1408 = vsel %vm1401, %v1376, %v710
      %v1409 = vsel %vm1401, %v1377, %v712
      %v1410 = vsel %vm1401, %v1378, %v714
      %v1411 = vsel %vm1401, %v1379, %v716
      %v1412 = vsel %vm1401, %v1380, %v718
      %v1413 = vsel %vm1401, %v1381, %v720
      %v1414 = vsel %vm1401, %v1382, %v722
      %v1415 = vsel %vm1401, %v1383, %v724
      %v1416 = vsel %vm1401, %v1384, %v726
      %v1417 = vsel %vm1401, %v1385, %v728
      %v1418 = vsel %vm1401, %v1386, %v730
      %v1419 = vsel %vm1401, %v1387, %v732
      %v1420 = vsel %vm1401, %v1388, %v734
      %v1421 = vsel %vm1401, %v1389, %v736
      %v1422 = vsel %vm1401, %v1390, %v738
      %v1423 = vsel %vm1401, %v1391, %v740
      %v1424 = vsel %vm1401, %v1392, %v742
      %v1425 = vsel %vm1401, %v1393, %v744
      %v1426 = vsel %vm1401, %v1394, %v746
      %v1427 = vsel %vm1401, %v1395, %v748
      %v1428 = vsel %vm1401, %v1396, %v750
      %v1429 = vsel %vm1401, %v1397, %v752
      %v1430 = vsel %vm1401, %v1398, %v754
      %v1431 = vsel %vm1401, %v1399, %v756
      %v1432 = vsel %vm1401, %v1400, %v758
      %vm1433 = vcmask 97280
      %v1434 = vsel %vm1433, %v1402, %v792
      %v1435 = vsel %vm1433, %v1402, %v794
      %v1436 = vsel %vm1433, %v1403, %v796
      %v1437 = vsel %vm1433, %v1404, %v798
      %v1438 = vsel %vm1433, %v1405, %v800
      %v1439 = vsel %vm1433, %v1406, %v802
      %v1440 = vsel %vm1433, %v1407, %v804
      %v1441 = vsel %vm1433, %v1408, %v806
      %v1442 = vsel %vm1433, %v1409, %v808
      %v1443 = vsel %vm1433, %v1410, %v810
      %v1444 = vsel %vm1433, %v1411, %v812
      %v1445 = vsel %vm1433, %v1412, %v814
      %v1446 = vsel %vm1433, %v1413, %v816
      %v1447 = vsel %vm1433, %v1414, %v818
      %v1448 = vsel %vm1433, %v1415, %v820
      %v1449 = vsel %vm1433, %v1416, %v822
      %v1450 = vsel %vm1433, %v1417, %v824
      %v1451 = vsel %vm1433, %v1418, %v826
      %v1452 = vsel %vm1433, %v1419, %v828
      %v1453 = vsel %vm1433, %v1420, %v830
      %v1454 = vsel %vm1433, %v1421, %v832
      %v1455 = vsel %vm1433, %v1422, %v834
      %v1456 = vsel %vm1433, %v1423, %v836
      %v1457 = vsel %vm1433, %v1424, %v838
      %v1458 = vsel %vm1433, %v1425, %v840
      %v1459 = vsel %vm1433, %v1426, %v842
      %v1460 = vsel %vm1433, %v1427, %v844
      %v1461 = vsel %vm1433, %v1428, %v846
      %v1462 = vsel %vm1433, %v1429, %v848
      %v1463 = vsel %vm1433, %v1430, %v850
      %v1464 = vsel %vm1433, %v1431, %v852
      %v1465 = vsel %vm1433, %v1432, %v854
      %vm1466 = vcmask 130048
      %v1467 = vsel %vm1466, %v1434, %v894
      %v1468 = vsel %vm1466, %v1435, %v896
      %v1469 = vsel %vm1466, %v1436, %v898
      %v1470 = vsel %vm1466, %v1437, %v900
      %v1471 = vsel %vm1466, %v1438, %v902
      %v1472 = vsel %vm1466, %v1439, %v904
      %v1473 = vsel %vm1466, %v1440, %v906
      %v1474 = vsel %vm1466, %v1441, %v908
      %v1475 = vsel %vm1466, %v1442, %v910
      %v1476 = vsel %vm1466, %v1443, %v912
      %v1477 = vsel %vm1466, %v1444, %v914
      %v1478 = vsel %vm1466, %v1445, %v916
      %v1479 = vsel %vm1466, %v1446, %v918
      %v1480 = vsel %vm1466, %v1447, %v920
      %v1481 = vsel %vm1466, %v1448, %v922
      %v1482 = vsel %vm1466, %v1449, %v924
      %v1483 = vsel %vm1466, %v1450, %v926
      %v1484 = vsel %vm1466, %v1451, %v928
      %v1485 = vsel %vm1466, %v1452, %v930
      %v1486 = vsel %vm1466, %v1453, %v932
      %v1487 = vsel %vm1466, %v1454, %v934
      %v1488 = vsel %vm1466, %v1455, %v936
      %v1489 = vsel %vm1466, %v1456, %v938
      %v1490 = vsel %vm1466, %v1457, %v940
      %v1491 = vsel %vm1466, %v1458, %v942
      %v1492 = vsel %vm1466, %v1459, %v944
      %v1493 = vsel %vm1466, %v1460, %v946
      %v1494 = vsel %vm1466, %v1461, %v948
      %v1495 = vsel %vm1466, %v1462, %v950
      %v1496 = vsel %vm1466, %v1463, %v952
      %v1497 = vsel %vm1466, %v1464, %v954
      %v1498 = vsel %vm1466, %v1465, %v956
      %vm1499 = vcmask 162816
      %v1500 = vsel %vm1499, %v1467, %v995
      %v1501 = vsel %vm1499, %v1468, %v997
      %v1502 = vsel %vm1499, %v1469, %v999
      %v1503 = vsel %vm1499, %v1470, %v1001
      %v1504 = vsel %vm1499, %v1471, %v1003
      %v1505 = vsel %vm1499, %v1472, %v1005
      %v1506 = vsel %vm1499, %v1473, %v1007
      %v1507 = vsel %vm1499, %v1474, %v1009
      %v1508 = vsel %vm1499, %v1475, %v1011
      %v1509 = vsel %vm1499, %v1476, %v1013
      %v1510 = vsel %vm1499, %v1477, %v1015
      %v1511 = vsel %vm1499, %v1478, %v1017
      %v1512 = vsel %vm1499, %v1479, %v1019
      %v1513 = vsel %vm1499, %v1480, %v1021
      %v1514 = vsel %vm1499, %v1481, %v1023
      %v1515 = vsel %vm1499, %v1482, %v1025
      %v1516 = vsel %vm1499, %v1483, %v1027
      %v1517 = vsel %vm1499, %v1484, %v1029
      %v1518 = vsel %vm1499, %v1485, %v1031
      %v1519 = vsel %vm1499, %v1486, %v1033
      %v1520 = vsel %vm1499, %v1487, %v1035
      %v1521 = vsel %vm1499, %v1488, %v1037
      %v1522 = vsel %vm1499, %v1489, %v1039
      %v1523 = vsel %vm1499, %v1490, %v1041
      %v1524 = vsel %vm1499, %v1491, %v1043
      %v1525 = vsel %vm1499, %v1492, %v1045
      %v1526 = vsel %vm1499, %v1493, %v1047
      %v1527 = vsel %vm1499, %v1494, %v1049
      %v1528 = vsel %vm1499, %v1495, %v1051
      %v1529 = vsel %vm1499, %v1496, %v1053
      %v1530 = vsel %vm1499, %v1497, %v1055
      %v1531 = vsel %vm1499, %v1498, %v1057
      %vm1532 = vcmask 195584
      %v1533 = vsel %vm1532, %v1500, %v1091
      %v1534 = vsel %vm1532, %v1501, %v1093
      %v1535 = vsel %vm1532, %v1502, %v1095
      %v1536 = vsel %vm1532, %v1503, %v1097
      %v1537 = vsel %vm1532, %v1504, %v1099
      %v1538 = vsel %vm1532, %v1505, %v1101
      %v1539 = vsel %vm1532, %v1506, %v1103
      %v1540 = vsel %vm1532, %v1507, %v1105
      %v1541 = vsel %vm1532, %v1508, %v1107
      %v1542 = vsel %vm1532, %v1509, %v1109
      %v1543 = vsel %vm1532, %v1510, %v1111
      %v1544 = vsel %vm1532, %v1511, %v1113
      %v1545 = vsel %vm1532, %v1512, %v1115
      %v1546 = vsel %vm1532, %v1513, %v1117
      %v1547 = vsel %vm1532, %v1514, %v1119
      %v1548 = vsel %vm1532, %v1515, %v1121
      %v1549 = vsel %vm1532, %v1516, %v1123
      %v1550 = vsel %vm1532, %v1517, %v1125
      %v1551 = vsel %vm1532, %v1518, %v1127
      %v1552 = vsel %vm1532, %v1519, %v1129
      %v1553 = vsel %vm1532, %v1520, %v1131
      %v1554 = vsel %vm1532, %v1521, %v1133
      %v1555 = vsel %vm1532, %v1522, %v1135
      %v1556 = vsel %vm1532, %v1523, %v1137
      %v1557 = vsel %vm1532, %v1524, %v1139
      %v1558 = vsel %vm1532, %v1525, %v1141
      %v1559 = vsel %vm1532, %v1526, %v1143
      %v1560 = vsel %vm1532, %v1527, %v1145
      %v1561 = vsel %vm1532, %v1528, %v1147
      %v1562 = vsel %vm1532, %v1529, %v1149
      %v1563 = vsel %vm1532, %v1530, %v1151
      %v1564 = vsel %vm1532, %v1531, %v1151
      %vm1565 = vcmask 228352
      %v1566 = vsel %vm1565, %v1533, %v1184
      %v1567 = vsel %vm1565, %v1534, %v1186
      %v1568 = vsel %vm1565, %v1535, %v1188
      %v1569 = vsel %vm1565, %v1536, %v1190
      %v1570 = vsel %vm1565, %v1537, %v1192
      %v1571 = vsel %vm1565, %v1538, %v1194
      %v1572 = vsel %vm1565, %v1539, %v1196
      %v1573 = vsel %vm1565, %v1540, %v1198
      %v1574 = vsel %vm1565, %v1541, %v1200
      %v1575 = vsel %vm1565, %v1542, %v1202
      %v1576 = vsel %vm1565, %v1543, %v1204
      %v1577 = vsel %vm1565, %v1544, %v1206
      %v1578 = vsel %vm1565, %v1545, %v1208
      %v1579 = vsel %vm1565, %v1546, %v1210
      %v1580 = vsel %vm1565, %v1547, %v1212
      %v1581 = vsel %vm1565, %v1548, %v1214
      %v1582 = vsel %vm1565, %v1549, %v1216
      %v1583 = vsel %vm1565, %v1550, %v1218
      %v1584 = vsel %vm1565, %v1551, %v1220
      %v1585 = vsel %vm1565, %v1552, %v1222
      %v1586 = vsel %vm1565, %v1553, %v1224
      %v1587 = vsel %vm1565, %v1554, %v1226
      %v1588 = vsel %vm1565, %v1555, %v1228
      %v1589 = vsel %vm1565, %v1556, %v1230
      %v1590 = vsel %vm1565, %v1557, %v1232
      %v1591 = vsel %vm1565, %v1558, %v1234
      %v1592 = vsel %vm1565, %v1559, %v1236
      %v1593 = vsel %vm1565, %v1560, %v1238
      %v1594 = vsel %vm1565, %v1561, %v1240
      %v1595 = vsel %vm1565, %v1562, %v1242
      %v1596 = vsel %vm1565, %v1563, %v1244
      %v1597 = vsel %vm1565, %v1564, %v1244
      %vm1598 = vcmask 261120
      %v1599 = vsel %vm1598, %v1566, %v1277
      %v1600 = vsel %vm1598, %v1567, %v1279
      %v1601 = vsel %vm1598, %v1568, %v1281
      %v1602 = vsel %vm1598, %v1569, %v1283
      %v1603 = vsel %vm1598, %v1570, %v1285
      %v1604 = vsel %vm1598, %v1571, %v1287
      %v1605 = vsel %vm1598, %v1572, %v1289
      %v1606 = vsel %vm1598, %v1573, %v1291
      %v1607 = vsel %vm1598, %v1574, %v1293
      %v1608 = vsel %vm1598, %v1575, %v1295
      %v1609 = vsel %vm1598, %v1576, %v1297
      %v1610 = vsel %vm1598, %v1577, %v1299
      %v1611 = vsel %vm1598, %v1578, %v1301
      %v1612 = vsel %vm1598, %v1579, %v1303
      %v1613 = vsel %vm1598, %v1580, %v1305
      %v1614 = vsel %vm1598, %v1581, %v1307
      %v1615 = vsel %vm1598, %v1582, %v1309
      %v1616 = vsel %vm1598, %v1583, %v1311
      %v1617 = vsel %vm1598, %v1584, %v1313
      %v1618 = vsel %vm1598, %v1585, %v1315
      %v1619 = vsel %vm1598, %v1586, %v1317
      %v1620 = vsel %vm1598, %v1587, %v1319
      %v1621 = vsel %vm1598, %v1588, %v1321
      %v1622 = vsel %vm1598, %v1589, %v1323
      %v1623 = vsel %vm1598, %v1590, %v1325
      %v1624 = vsel %vm1598, %v1591, %v1327
      %v1625 = vsel %vm1598, %v1592, %v1329
      %v1626 = vsel %vm1598, %v1593, %v1331
      %v1627 = vsel %vm1598, %v1594, %v1333
      %v1628 = vsel %vm1598, %v1595, %v1335
      %v1629 = vsel %vm1598, %v1596, %v1337
      %v1630 = vsel %vm1598, %v1597, %v1337
      %v1631 = vld [vmem:[%s1] sm:$0xff]
      %v1632 = vld [vmem:[%s1 + $0x8] sm:$0xff]
      %v1633 = vld [vmem:[%s1 + $0x10] sm:$0xff]
      %v1634 = vld [vmem:[%s1 + $0x18] sm:$0xff]
      %v1635 = vld [vmem:[%s1 + $0x20] sm:$0xf]
      %v1636 = vld [vmem:[%s2] sm:$0x1]
      %v1638 = vlaneseq
      %v1639 = vshrl.u32 %v1638, 7
      %v1640 = vsub.s32 0, %v1639
      %v1641 = vrot.slane %v1636, %v1640
      %vm1643 = vcmask 293888
      %v1645 = vsel %vm1643, %v1599, 0
      %v1648 = vsel %vm1643, %v1600, 0
      %v1651 = vsel %vm1643, %v1601, 0
      %v1654 = vsel %vm1643, %v1602, 0
      %v1657 = vsel %vm1643, %v1603, 0
      %v1660 = vsel %vm1643, %v1604, 0
      %v1663 = vsel %vm1643, %v1605, 0
      %v1666 = vsel %vm1643, %v1606, 0
      %v1669 = vsel %vm1643, %v1607, 0
      %v1672 = vsel %vm1643, %v1608, 0
      %v1675 = vsel %vm1643, %v1609, 0
      %v1678 = vsel %vm1643, %v1610, 0
      %v1681 = vsel %vm1643, %v1611, 0
      %v1684 = vsel %vm1643, %v1612, 0
      %v1687 = vsel %vm1643, %v1613, 0
      %v1690 = vsel %vm1643, %v1614, 0
      %v1693 = vsel %vm1643, %v1615, 0
      %v1696 = vsel %vm1643, %v1616, 0
      %v1699 = vsel %vm1643, %v1617, 0
      %v1702 = vsel %vm1643, %v1618, 0
      %v1705 = vsel %vm1643, %v1619, 0
      %v1708 = vsel %vm1643, %v1620, 0
      %v1711 = vsel %vm1643, %v1621, 0
      %v1714 = vsel %vm1643, %v1622, 0
      %v1717 = vsel %vm1643, %v1623, 0
      %v1720 = vsel %vm1643, %v1624, 0
      %v1723 = vsel %vm1643, %v1625, 0
      %v1726 = vsel %vm1643, %v1626, 0
      %v1729 = vsel %vm1643, %v1627, 0
      %v1732 = vsel %vm1643, %v1628, 0
      %v1735 = vsel %vm1643, %v1629, 0
      %v1738 = vsel %vm1643, %v1630, 0
      %vm1740 = vcmask 1043456
      %v1742 = vsel %vm1740, %v1635, 0
      %1744 = vmatprep.subr.mxu0 0.0
      %1745 = vmatpush1.msra.mxu0 %v1631
      %1746 = vmatprep.subr.mxu0 0.0
      %1747 = vmatpush1.msra.mxu0 %v1632
      %1748 = vmatprep.subr.mxu0 0.0
      %1749 = vmatpush1.msra.mxu0 %v1633
      %1750 = vmatprep.subr.mxu0 0.0
      %1751 = vmatpush1.msra.mxu0 %v1634
      %1752 = vmatprep.subr.mxu0 0.0
      %1753 = vmatpush1.msra.mxu0 %v1742
      %1754 = vmatprep.subr.mxu0 0.0
      %1755 = vmatpush1.msra.mxu0 0.0
      %1756 = vmatprep.subr.mxu0 0.0
      %1757 = vmatpush1.msra.mxu0 0.0
      %1758 = vmatprep.subr.mxu0 0.0
      %1759 = vmatpush1.msra.mxu0 0.0
      %1760 = vmatprep.subr.mxu0 0.0
      %1761 = vmatpush1.msra.mxu0 0.0
      %1762 = vmatprep.subr.mxu0 0.0
      %1763 = vmatpush1.msra.mxu0 0.0
      %1764 = vmatprep.subr.mxu0 0.0
      %1765 = vmatpush1.msra.mxu0 0.0
      %1766 = vmatprep.subr.mxu0 0.0
      %1767 = vmatpush1.msra.mxu0 0.0
      %1768 = vmatprep.subr.mxu0 0.0
      %1769 = vmatpush1.msra.mxu0 0.0
      %1770 = vmatprep.subr.mxu0 0.0
      %1771 = vmatpush1.msra.mxu0 0.0
      %1772 = vmatprep.subr.mxu0 0.0
      %1773 = vmatpush1.msra.mxu0 0.0
      %1774 = vmatprep.subr.mxu0 0.0
      %1775 = vmatpush1.msra.mxu0 0.0
      %1776 = vmatprep.subr.mxu0 0.0
      %1777 = vmatpush1.msra.mxu0 0.0
      %1778 = vmatprep.subr.mxu0 0.0
      %1779 = vmatpush1.msra.mxu0 0.0
      %1780 = vmatprep.subr.mxu0 0.0
      %1781 = vmatpush1.msra.mxu0 0.0
      %1782 = vmatprep.subr.mxu0 0.0
      %1783 = vmatpush1.msra.mxu0 0.0
      %1784 = vmatprep.subr.mxu0 0.0
      %1785 = vmatpush1.msra.mxu0 0.0
      %1786 = vmatprep.subr.mxu0 0.0
      %1787 = vmatpush1.msra.mxu0 0.0
      %1788 = vmatprep.subr.mxu0 0.0
      %1789 = vmatpush1.msra.mxu0 0.0
      %1790 = vmatprep.subr.mxu0 0.0
      %1791 = vmatpush1.msra.mxu0 0.0
      %1792 = vmatprep.subr.mxu0 0.0
      %1793 = vmatpush1.msra.mxu0 0.0
      %1794 = vmatprep.subr.mxu0 0.0
      %1795 = vmatpush1.msra.mxu0 0.0
      %1796 = vmatprep.subr.mxu0 0.0
      %1797 = vmatpush1.msra.mxu0 0.0
      %1798 = vmatprep.subr.mxu0 0.0
      %1799 = vmatpush1.msra.mxu0 0.0
      %1800 = vmatprep.subr.mxu0 0.0
      %1801 = vmatpush1.msra.mxu0 0.0
      %1802 = vmatprep.subr.mxu0 0.0
      %1803 = vmatpush1.msra.mxu0 0.0
      %1804 = vmatprep.subr.mxu0 0.0
      %1805 = vmatpush1.msra.mxu0 0.0
      %1806 = vmatprep.subr.mxu0 0.0
      %1807 = vmatpush1.msra.mxu0 0.0
      %1808 = vmatprep.mubr.f32.mxu0 0.0
      %1809 = vmatmul.mubr.f32.gmra.mrb[0].mxu0 %v1645
      %v1810 = vpop.f32.mrb[0].mxu0
      %v1811 = vadd.f32 %v1641, %v1810
      %v1812 = vpop.f32.mrb[0].mxu0
      %1813 = vmatprep.mubr.f32.mxu0 0.0
      %1814 = vmatmul.mubr.f32.gmra.mrb[0].mxu0 %v1648
      %v1815 = vpop.f32.mrb[0].mxu0
      %v1816 = vadd.f32 %v1641, %v1815
      %v1817 = vpop.f32.mrb[0].mxu0
      %1818 = vmatprep.mubr.f32.mxu0 0.0
      %1819 = vmatmul.mubr.f32.gmra.mrb[0].mxu0 %v1651
      %v1820 = vpop.f32.mrb[0].mxu0
      %v1821 = vadd.f32 %v1641, %v1820
      %v1822 = vpop.f32.mrb[0].mxu0
      %1823 = vmatprep.mubr.f32.mxu0 0.0
      %1824 = vmatmul.mubr.f32.gmra.mrb[0].mxu0 %v1654
      %v1825 = vpop.f32.mrb[0].mxu0
      %v1826 = vadd.f32 %v1641, %v1825
      %v1827 = vpop.f32.mrb[0].mxu0
      %1828 = vmatprep.mubr.f32.mxu0 0.0
      %1829 = vmatmul.mubr.f32.gmra.mrb[0].mxu0 %v1657
      %v1830 = vpop.f32.mrb[0].mxu0
      %v1831 = vadd.f32 %v1641, %v1830
      %v1832 = vpop.f32.mrb[0].mxu0
      %1833 = vmatprep.mubr.f32.mxu0 0.0
      %1834 = vmatmul.mubr.f32.gmra.mrb[0].mxu0 %v1660
      %v1835 = vpop.f32.mrb[0].mxu0
      %v1836 = vadd.f32 %v1641, %v1835
      %v1837 = vpop.f32.mrb[0].mxu0
      %1838 = vmatprep.mubr.f32.mxu0 0.0
      %1839 = vmatmul.mubr.f32.gmra.mrb[0].mxu0 %v1663
      %v1840 = vpop.f32.mrb[0].mxu0
      %v1841 = vadd.f32 %v1641, %v1840
      %v1842 = vpop.f32.mrb[0].mxu0
      %1843 = vmatprep.mubr.f32.mxu0 0.0
      %1844 = vmatmul.mubr.f32.gmra.mrb[0].mxu0 %v1666
      %v1845 = vpop.f32.mrb[0].mxu0
      %v1846 = vadd.f32 %v1641, %v1845
      %v1847 = vpop.f32.mrb[0].mxu0
      %1848 = vmatprep.mubr.f32.mxu0 0.0
      %1849 = vmatmul.mubr.f32.gmra.mrb[0].mxu0 %v1669
      %v1850 = vpop.f32.mrb[0].mxu0
      %v1851 = vadd.f32 %v1641, %v1850
      %v1852 = vpop.f32.mrb[0].mxu0
      %1853 = vmatprep.mubr.f32.mxu0 0.0
      %1854 = vmatmul.mubr.f32.gmra.mrb[0].mxu0 %v1672
      %v1855 = vpop.f32.mrb[0].mxu0
      %v1856 = vadd.f32 %v1641, %v1855
      %v1857 = vpop.f32.mrb[0].mxu0
      %1858 = vmatprep.mubr.f32.mxu0 0.0
      %1859 = vmatmul.mubr.f32.gmra.mrb[0].mxu0 %v1675
      %v1860 = vpop.f32.mrb[0].mxu0
      %v1861 = vadd.f32 %v1641, %v1860
      %v1862 = vpop.f32.mrb[0].mxu0
      %1863 = vmatprep.mubr.f32.mxu0 0.0
      %1864 = vmatmul.mubr.f32.gmra.mrb[0].mxu0 %v1678
      %v1865 = vpop.f32.mrb[0].mxu0
      %v1866 = vadd.f32 %v1641, %v1865
      %v1867 = vpop.f32.mrb[0].mxu0
      %1868 = vmatprep.mubr.f32.mxu0 0.0
      %1869 = vmatmul.mubr.f32.gmra.mrb[0].mxu0 %v1681
      %v1870 = vpop.f32.mrb[0].mxu0
      %v1871 = vadd.f32 %v1641, %v1870
      %v1872 = vpop.f32.mrb[0].mxu0
      %1873 = vmatprep.mubr.f32.mxu0 0.0
      %1874 = vmatmul.mubr.f32.gmra.mrb[0].mxu0 %v1684
      %v1875 = vpop.f32.mrb[0].mxu0
      %v1876 = vadd.f32 %v1641, %v1875
      %v1877 = vpop.f32.mrb[0].mxu0
      %1878 = vmatprep.mubr.f32.mxu0 0.0
      %1879 = vmatmul.mubr.f32.gmra.mrb[0].mxu0 %v1687
      %v1880 = vpop.f32.mrb[0].mxu0
      %v1881 = vadd.f32 %v1641, %v1880
      %v1882 = vpop.f32.mrb[0].mxu0
      %1883 = vmatprep.mubr.f32.mxu0 0.0
      %1884 = vmatmul.mubr.f32.gmra.mrb[0].mxu0 %v1690
      %v1885 = vpop.f32.mrb[0].mxu0
      %v1886 = vadd.f32 %v1641, %v1885
      %v1887 = vpop.f32.mrb[0].mxu0
      %1888 = vmatprep.mubr.f32.mxu0 0.0
      %1889 = vmatmul.mubr.f32.gmra.mrb[0].mxu0 %v1693
      %v1890 = vpop.f32.mrb[0].mxu0
      %v1891 = vadd.f32 %v1641, %v1890
      %v1892 = vpop.f32.mrb[0].mxu0
      %1893 = vmatprep.mubr.f32.mxu0 0.0
      %1894 = vmatmul.mubr.f32.gmra.mrb[0].mxu0 %v1696
      %v1895 = vpop.f32.mrb[0].mxu0
      %v1896 = vadd.f32 %v1641, %v1895
      %v1897 = vpop.f32.mrb[0].mxu0
      %1898 = vmatprep.mubr.f32.mxu0 0.0
      %1899 = vmatmul.mubr.f32.gmra.mrb[0].mxu0 %v1699
      %v1900 = vpop.f32.mrb[0].mxu0
      %v1901 = vadd.f32 %v1641, %v1900
      %v1902 = vpop.f32.mrb[0].mxu0
      %1903 = vmatprep.mubr.f32.mxu0 0.0
      %1904 = vmatmul.mubr.f32.gmra.mrb[0].mxu0 %v1702
      %v1905 = vpop.f32.mrb[0].mxu0
      %v1906 = vadd.f32 %v1641, %v1905
      %v1907 = vpop.f32.mrb[0].mxu0
      %1908 = vmatprep.mubr.f32.mxu0 0.0
      %1909 = vmatmul.mubr.f32.gmra.mrb[0].mxu0 %v1705
      %v1910 = vpop.f32.mrb[0].mxu0
      %v1911 = vadd.f32 %v1641, %v1910
      %v1912 = vpop.f32.mrb[0].mxu0
      %1913 = vmatprep.mubr.f32.mxu0 0.0
      %1914 = vmatmul.mubr.f32.gmra.mrb[0].mxu0 %v1708
      %v1915 = vpop.f32.mrb[0].mxu0
      %v1916 = vadd.f32 %v1641, %v1915
      %v1917 = vpop.f32.mrb[0].mxu0
      %1918 = vmatprep.mubr.f32.mxu0 0.0
      %1919 = vmatmul.mubr.f32.gmra.mrb[0].mxu0 %v1711
      %v1920 = vpop.f32.mrb[0].mxu0
      %v1921 = vadd.f32 %v1641, %v1920
      %v1922 = vpop.f32.mrb[0].mxu0
      %1923 = vmatprep.mubr.f32.mxu0 0.0
      %1924 = vmatmul.mubr.f32.gmra.mrb[0].mxu0 %v1714
      %v1925 = vpop.f32.mrb[0].mxu0
      %v1926 = vadd.f32 %v1641, %v1925
      %v1927 = vpop.f32.mrb[0].mxu0
      %1928 = vmatprep.mubr.f32.mxu0 0.0
      %1929 = vmatmul.mubr.f32.gmra.mrb[0].mxu0 %v1717
      %v1930 = vpop.f32.mrb[0].mxu0
      %v1931 = vadd.f32 %v1641, %v1930
      %v1932 = vpop.f32.mrb[0].mxu0
      %1933 = vmatprep.mubr.f32.mxu0 0.0
      %1934 = vmatmul.mubr.f32.gmra.mrb[0].mxu0 %v1720
      %v1935 = vpop.f32.mrb[0].mxu0
      %v1936 = vadd.f32 %v1641, %v1935
      %v1937 = vpop.f32.mrb[0].mxu0
      %1938 = vmatprep.mubr.f32.mxu0 0.0
      %1939 = vmatmul.mubr.f32.gmra.mrb[0].mxu0 %v1723
      %v1940 = vpop.f32.mrb[0].mxu0
      %v1941 = vadd.f32 %v1641, %v1940
      %v1942 = vpop.f32.mrb[0].mxu0
      %1943 = vmatprep.mubr.f32.mxu0 0.0
      %1944 = vmatmul.mubr.f32.gmra.mrb[0].mxu0 %v1726
      %v1945 = vpop.f32.mrb[0].mxu0
      %v1946 = vadd.f32 %v1641, %v1945
      %v1947 = vpop.f32.mrb[0].mxu0
      %1948 = vmatprep.mubr.f32.mxu0 0.0
      %1949 = vmatmul.mubr.f32.gmra.mrb[0].mxu0 %v1729
      %v1950 = vpop.f32.mrb[0].mxu0
      %v1951 = vadd.f32 %v1641, %v1950
      %v1952 = vpop.f32.mrb[0].mxu0
      %1953 = vmatprep.mubr.f32.mxu0 0.0
      %1954 = vmatmul.mubr.f32.gmra.mrb[0].mxu0 %v1732
      %v1955 = vpop.f32.mrb[0].mxu0
      %v1956 = vadd.f32 %v1641, %v1955
      %v1957 = vpop.f32.mrb[0].mxu0
      %1958 = vmatprep.mubr.f32.mxu0 0.0
      %1959 = vmatmul.mubr.f32.gmra.mrb[0].mxu0 %v1735
      %v1960 = vpop.f32.mrb[0].mxu0
      %v1961 = vadd.f32 %v1641, %v1960
      %v1962 = vpop.f32.mrb[0].mxu0
      %1963 = vmatprep.mubr.f32.mxu0 0.0
      %1964 = vmatmul.mubr.f32.gmra.mrb[0].mxu0 %v1738
      %v1965 = vpop.f32.mrb[0].mxu0
      %v1966 = vadd.f32 %v1641, %v1965
      %v1967 = vpop.f32.mrb[0].mxu0
      %1968 = vdwg.mxu0
      %v1969 = vmax.f32 %v1811, 0.0
      %v1970 = vmax.f32 %v1816, 0.0
      %v1971 = vmax.f32 %v1821, 0.0
      %v1972 = vmax.f32 %v1826, 0.0
      %v1973 = vmax.f32 %v1831, 0.0
      %v1974 = vmax.f32 %v1836, 0.0
      %v1975 = vmax.f32 %v1841, 0.0
      %v1976 = vmax.f32 %v1846, 0.0
      %v1977 = vmax.f32 %v1851, 0.0
      %v1978 = vmax.f32 %v1856, 0.0
      %v1979 = vmax.f32 %v1861, 0.0
      %v1980 = vmax.f32 %v1866, 0.0
      %v1981 = vmax.f32 %v1871, 0.0
      %v1982 = vmax.f32 %v1876, 0.0
      %v1983 = vmax.f32 %v1881, 0.0
      %v1984 = vmax.f32 %v1886, 0.0
      %v1985 = vmax.f32 %v1891, 0.0
      %v1986 = vmax.f32 %v1896, 0.0
      %v1987 = vmax.f32 %v1901, 0.0
      %v1988 = vmax.f32 %v1906, 0.0
      %v1989 = vmax.f32 %v1911, 0.0
      %v1990 = vmax.f32 %v1916, 0.0
      %v1991 = vmax.f32 %v1921, 0.0
      %v1992 = vmax.f32 %v1926, 0.0
      %v1993 = vmax.f32 %v1931, 0.0
      %v1994 = vmax.f32 %v1936, 0.0
      %v1995 = vmax.f32 %v1941, 0.0
      %v1996 = vmax.f32 %v1946, 0.0
      %v1997 = vmax.f32 %v1951, 0.0
      %v1998 = vmax.f32 %v1956, 0.0
      %v1999 = vmax.f32 %v1961, 0.0
      %v2000 = vmax.f32 %v1966, 0.0
      %v2033 = vrot.slane %v1969, 7
      %v2034 = vrot.slane %v1970, 7
      %v2035 = vsel %vm289, %v2033, %v2034
      %v2036 = vrot.slane %v1971, 7
      %v2037 = vrot.slane %v1972, 7
      %v2038 = vsel %vm289, %v2036, %v2037
      %v2039 = vrot.slane %v1973, 7
      %v2040 = vrot.slane %v1974, 7
      %v2041 = vsel %vm289, %v2039, %v2040
      %v2042 = vrot.slane %v1975, 7
      %v2043 = vrot.slane %v1976, 7
      %v2044 = vsel %vm289, %v2042, %v2043
      %v2045 = vrot.slane %v1977, 7
      %v2046 = vrot.slane %v1978, 7
      %v2047 = vsel %vm289, %v2045, %v2046
      %v2048 = vrot.slane %v1979, 7
      %v2049 = vrot.slane %v1980, 7
      %v2050 = vsel %vm289, %v2048, %v2049
      %v2051 = vrot.slane %v1981, 7
      %v2052 = vrot.slane %v1982, 7
      %v2053 = vsel %vm289, %v2051, %v2052
      %v2054 = vrot.slane %v1983, 7
      %v2055 = vrot.slane %v1984, 7
      %v2056 = vsel %vm289, %v2054, %v2055
      %v2057 = vrot.slane %v1985, 7
      %v2058 = vrot.slane %v1986, 7
      %v2059 = vsel %vm289, %v2057, %v2058
      %v2060 = vrot.slane %v1987, 7
      %v2061 = vrot.slane %v1988, 7
      %v2062 = vsel %vm289, %v2060, %v2061
      %v2063 = vrot.slane %v1989, 7
      %v2064 = vrot.slane %v1990, 7
      %v2065 = vsel %vm289, %v2063, %v2064
      %v2066 = vrot.slane %v1991, 7
      %v2067 = vrot.slane %v1992, 7
      %v2068 = vsel %vm289, %v2066, %v2067
      %v2069 = vrot.slane %v1993, 7
      %v2070 = vrot.slane %v1994, 7
      %v2071 = vsel %vm289, %v2069, %v2070
      %v2072 = vrot.slane %v1995, 7
      %v2073 = vrot.slane %v1996, 7
      %v2074 = vsel %vm289, %v2072, %v2073
      %v2075 = vrot.slane %v1997, 7
      %v2076 = vrot.slane %v1998, 7
      %v2077 = vsel %vm289, %v2075, %v2076
      %v2078 = vrot.slane %v1999, 7
      %v2079 = vrot.slane %v2000, 7
      %v2080 = vsel %vm289, %v2078, %v2079
      %v2128 = vsel %vm289, 0.0, %v2033
      %v2129 = vsel %vm289, 0.0, %v2036
      %v2130 = vsel %vm289, 0.0, %v2039
      %v2131 = vsel %vm289, 0.0, %v2042
      %v2132 = vsel %vm289, 0.0, %v2045
      %v2133 = vsel %vm289, 0.0, %v2048
      %v2134 = vsel %vm289, 0.0, %v2051
      %v2135 = vsel %vm289, 0.0, %v2054
      %v2136 = vsel %vm289, 0.0, %v2057
      %v2137 = vsel %vm289, 0.0, %v2060
      %v2138 = vsel %vm289, 0.0, %v2063
      %v2139 = vsel %vm289, 0.0, %v2066
      %v2140 = vsel %vm289, 0.0, %v2069
      %v2141 = vsel %vm289, 0.0, %v2072
      %v2142 = vsel %vm289, 0.0, %v2075
      %v2143 = vsel %vm289, 0.0, %v2078
      %v2144 = vsel %vm289, %v2034, 0.0
      %v2145 = vsel %vm289, %v2037, 0.0
      %v2146 = vsel %vm289, %v2040, 0.0
      %v2147 = vsel %vm289, %v2043, 0.0
      %v2148 = vsel %vm289, %v2046, 0.0
      %v2149 = vsel %vm289, %v2049, 0.0
      %v2150 = vsel %vm289, %v2052, 0.0
      %v2151 = vsel %vm289, %v2055, 0.0
      %v2152 = vsel %vm289, %v2058, 0.0
      %v2153 = vsel %vm289, %v2061, 0.0
      %v2154 = vsel %vm289, %v2064, 0.0
      %v2155 = vsel %vm289, %v2067, 0.0
      %v2156 = vsel %vm289, %v2070, 0.0
      %v2157 = vsel %vm289, %v2073, 0.0
      %v2158 = vsel %vm289, %v2076, 0.0
      %v2159 = vsel %vm289, %v2079, 0.0
      %v2190 = vrot.slane %v2128, 1
      %v2191 = vrot.slane %v2035, 1
      %v2192 = vsel %vm448, %v2190, %v2191
      %v2193 = vrot.slane %v2144, 1
      %v2194 = vsel %vm448, %v2191, %v2193
      %v2195 = vrot.slane %v2129, 1
      %v2196 = vrot.slane %v2038, 1
      %v2197 = vsel %vm448, %v2195, %v2196
      %v2198 = vrot.slane %v2145, 1
      %v2199 = vsel %vm448, %v2196, %v2198
      %v2200 = vrot.slane %v2130, 1
      %v2201 = vrot.slane %v2041, 1
      %v2202 = vsel %vm448, %v2200, %v2201
      %v2203 = vrot.slane %v2146, 1
      %v2204 = vsel %vm448, %v2201, %v2203
      %v2205 = vrot.slane %v2131, 1
      %v2206 = vrot.slane %v2044, 1
      %v2207 = vsel %vm448, %v2205, %v2206
      %v2208 = vrot.slane %v2147, 1
      %v2209 = vsel %vm448, %v2206, %v2208
      %v2210 = vrot.slane %v2132, 1
      %v2211 = vrot.slane %v2047, 1
      %v2212 = vsel %vm448, %v2210, %v2211
      %v2213 = vrot.slane %v2148, 1
      %v2214 = vsel %vm448, %v2211, %v2213
      %v2215 = vrot.slane %v2133, 1
      %v2216 = vrot.slane %v2050, 1
      %v2217 = vsel %vm448, %v2215, %v2216
      %v2218 = vrot.slane %v2149, 1
      %v2219 = vsel %vm448, %v2216, %v2218
      %v2220 = vrot.slane %v2134, 1
      %v2221 = vrot.slane %v2053, 1
      %v2222 = vsel %vm448, %v2220, %v2221
      %v2223 = vrot.slane %v2150, 1
      %v2224 = vsel %vm448, %v2221, %v2223
      %v2225 = vrot.slane %v2135, 1
      %v2226 = vrot.slane %v2056, 1
      %v2227 = vsel %vm448, %v2225, %v2226
      %v2228 = vrot.slane %v2151, 1
      %v2229 = vsel %vm448, %v2226, %v2228
      %v2230 = vrot.slane %v2136, 1
      %v2231 = vrot.slane %v2059, 1
      %v2232 = vsel %vm448, %v2230, %v2231
      %v2233 = vrot.slane %v2152, 1
      %v2234 = vsel %vm448, %v2231, %v2233
      %v2235 = vrot.slane %v2137, 1
      %v2236 = vrot.slane %v2062, 1
      %v2237 = vsel %vm448, %v2235, %v2236
      %v2238 = vrot.slane %v2153, 1
      %v2239 = vsel %vm448, %v2236, %v2238
      %v2240 = vrot.slane %v2138, 1
      %v2241 = vrot.slane %v2065, 1
      %v2242 = vsel %vm448, %v2240, %v2241
      %v2243 = vrot.slane %v2154, 1
      %v2244 = vsel %vm448, %v2241, %v2243
      %v2245 = vrot.slane %v2139, 1
      %v2246 = vrot.slane %v2068, 1
      %v2247 = vsel %vm448, %v2245, %v2246
      %v2248 = vrot.slane %v2155, 1
      %v2249 = vsel %vm448, %v2246, %v2248
      %v2250 = vrot.slane %v2140, 1
      %v2251 = vrot.slane %v2071, 1
      %v2252 = vsel %vm448, %v2250, %v2251
      %v2253 = vrot.slane %v2156, 1
      %v2254 = vsel %vm448, %v2251, %v2253
      %v2255 = vrot.slane %v2141, 1
      %v2256 = vrot.slane %v2074, 1
      %v2257 = vsel %vm448, %v2255, %v2256
      %v2258 = vrot.slane %v2157, 1
      %v2259 = vsel %vm448, %v2256, %v2258
      %v2260 = vrot.slane %v2142, 1
      %v2261 = vrot.slane %v2077, 1
      %v2262 = vsel %vm448, %v2260, %v2261
      %v2263 = vrot.slane %v2158, 1
      %v2264 = vsel %vm448, %v2261, %v2263
      %2265 = vrot.lane.b32.xlu0 %v2192, 4
      %v2266 = vpop.permute.xlu0 %2265
      %2267 = vrot.lane.b32.xlu0 %v2194, 4
      %v2268 = vpop.permute.xlu0 %2267
      %2269 = vrot.lane.b32.xlu0 %v2197, 4
      %v2270 = vpop.permute.xlu0 %2269
      %2271 = vrot.lane.b32.xlu0 %v2199, 4
      %v2272 = vpop.permute.xlu0 %2271
      %2273 = vrot.lane.b32.xlu0 %v2202, 4
      %v2274 = vpop.permute.xlu0 %2273
      %2275 = vrot.lane.b32.xlu0 %v2204, 4
      %v2276 = vpop.permute.xlu0 %2275
      %2277 = vrot.lane.b32.xlu0 %v2207, 4
      %v2278 = vpop.permute.xlu0 %2277
      %2279 = vrot.lane.b32.xlu0 %v2209, 4
      %v2280 = vpop.permute.xlu0 %2279
      %2281 = vrot.lane.b32.xlu0 %v2212, 4
      %v2282 = vpop.permute.xlu0 %2281
      %2283 = vrot.lane.b32.xlu0 %v2214, 4
      %v2284 = vpop.permute.xlu0 %2283
      %2285 = vrot.lane.b32.xlu0 %v2217, 4
      %v2286 = vpop.permute.xlu0 %2285
      %2287 = vrot.lane.b32.xlu0 %v2219, 4
      %v2288 = vpop.permute.xlu0 %2287
      %2289 = vrot.lane.b32.xlu0 %v2222, 4
      %v2290 = vpop.permute.xlu0 %2289
      %2291 = vrot.lane.b32.xlu0 %v2224, 4
      %v2292 = vpop.permute.xlu0 %2291
      %2293 = vrot.lane.b32.xlu0 %v2227, 4
      %v2294 = vpop.permute.xlu0 %2293
      %2295 = vrot.lane.b32.xlu0 %v2229, 4
      %v2296 = vpop.permute.xlu0 %2295
      %2297 = vrot.lane.b32.xlu0 %v2232, 4
      %v2298 = vpop.permute.xlu0 %2297
      %2299 = vrot.lane.b32.xlu0 %v2234, 4
      %v2300 = vpop.permute.xlu0 %2299
      %2301 = vrot.lane.b32.xlu0 %v2237, 4
      %v2302 = vpop.permute.xlu0 %2301
      %2303 = vrot.lane.b32.xlu0 %v2239, 4
      %v2304 = vpop.permute.xlu0 %2303
      %2305 = vrot.lane.b32.xlu0 %v2242, 4
      %v2306 = vpop.permute.xlu0 %2305
      %2307 = vrot.lane.b32.xlu0 %v2244, 4
      %v2308 = vpop.permute.xlu0 %2307
      %2309 = vrot.lane.b32.xlu0 %v2247, 4
      %v2310 = vpop.permute.xlu0 %2309
      %2311 = vrot.lane.b32.xlu0 %v2249, 4
      %v2312 = vpop.permute.xlu0 %2311
      %2313 = vrot.lane.b32.xlu0 %v2252, 4
      %v2314 = vpop.permute.xlu0 %2313
      %2315 = vrot.lane.b32.xlu0 %v2254, 4
      %v2316 = vpop.permute.xlu0 %2315
      %2317 = vrot.lane.b32.xlu0 %v2257, 4
      %v2318 = vpop.permute.xlu0 %2317
      %2319 = vrot.lane.b32.xlu0 %v2259, 4
      %v2320 = vpop.permute.xlu0 %2319
      %2321 = vrot.lane.b32.xlu0 %v2262, 4
      %v2322 = vpop.permute.xlu0 %2321
      %2323 = vrot.lane.b32.xlu0 %v2264, 4
      %v2324 = vpop.permute.xlu0 %2323
      %v2355 = vrot.slane %v2128, 2
      %v2356 = vrot.slane %v2035, 2
      %v2357 = vsel %vm619, %v2355, %v2356
      %v2358 = vrot.slane %v2144, 2
      %v2359 = vsel %vm619, %v2356, %v2358
      %v2360 = vrot.slane %v2129, 2
      %v2361 = vrot.slane %v2038, 2
      %v2362 = vsel %vm619, %v2360, %v2361
      %v2363 = vrot.slane %v2145, 2
      %v2364 = vsel %vm619, %v2361, %v2363
      %v2365 = vrot.slane %v2130, 2
      %v2366 = vrot.slane %v2041, 2
      %v2367 = vsel %vm619, %v2365, %v2366
      %v2368 = vrot.slane %v2146, 2
      %v2369 = vsel %vm619, %v2366, %v2368
      %v2370 = vrot.slane %v2131, 2
      %v2371 = vrot.slane %v2044, 2
      %v2372 = vsel %vm619, %v2370, %v2371
      %v2373 = vrot.slane %v2147, 2
      %v2374 = vsel %vm619, %v2371, %v2373
      %v2375 = vrot.slane %v2132, 2
      %v2376 = vrot.slane %v2047, 2
      %v2377 = vsel %vm619, %v2375, %v2376
      %v2378 = vrot.slane %v2148, 2
      %v2379 = vsel %vm619, %v2376, %v2378
      %v2380 = vrot.slane %v2133, 2
      %v2381 = vrot.slane %v2050, 2
      %v2382 = vsel %vm619, %v2380, %v2381
      %v2383 = vrot.slane %v2149, 2
      %v2384 = vsel %vm619, %v2381, %v2383
      %v2385 = vrot.slane %v2134, 2
      %v2386 = vrot.slane %v2053, 2
      %v2387 = vsel %vm619, %v2385, %v2386
      %v2388 = vrot.slane %v2150, 2
      %v2389 = vsel %vm619, %v2386, %v2388
      %v2390 = vrot.slane %v2135, 2
      %v2391 = vrot.slane %v2056, 2
      %v2392 = vsel %vm619, %v2390, %v2391
      %v2393 = vrot.slane %v2151, 2
      %v2394 = vsel %vm619, %v2391, %v2393
      %v2395 = vrot.slane %v2136, 2
      %v2396 = vrot.slane %v2059, 2
      %v2397 = vsel %vm619, %v2395, %v2396
      %v2398 = vrot.slane %v2152, 2
      %v2399 = vsel %vm619, %v2396, %v2398
      %v2400 = vrot.slane %v2137, 2
      %v2401 = vrot.slane %v2062, 2
      %v2402 = vsel %vm619, %v2400, %v2401
      %v2403 = vrot.slane %v2153, 2
      %v2404 = vsel %vm619, %v2401, %v2403
      %v2405 = vrot.slane %v2138, 2
      %v2406 = vrot.slane %v2065, 2
      %v2407 = vsel %vm619, %v2405, %v2406
      %v2408 = vrot.slane %v2154, 2
      %v2409 = vsel %vm619, %v2406, %v2408
      %v2410 = vrot.slane %v2139, 2
      %v2411 = vrot.slane %v2068, 2
      %v2412 = vsel %vm619, %v2410, %v2411
      %v2413 = vrot.slane %v2155, 2
      %v2414 = vsel %vm619, %v2411, %v2413
      %v2415 = vrot.slane %v2140, 2
      %v2416 = vrot.slane %v2071, 2
      %v2417 = vsel %vm619, %v2415, %v2416
      %v2418 = vrot.slane %v2156, 2
      %v2419 = vsel %vm619, %v2416, %v2418
      %v2420 = vrot.slane %v2141, 2
      %v2421 = vrot.slane %v2074, 2
      %v2422 = vsel %vm619, %v2420, %v2421
      %v2423 = vrot.slane %v2157, 2
      %v2424 = vsel %vm619, %v2421, %v2423
      %v2425 = vrot.slane %v2142, 2
      %v2426 = vrot.slane %v2077, 2
      %v2427 = vsel %vm619, %v2425, %v2426
      %v2428 = vrot.slane %v2158, 2
      %v2429 = vsel %vm619, %v2426, %v2428
      %2430 = vrot.lane.b32.xlu0 %v2357, 8
      %v2431 = vpop.permute.xlu0 %2430
      %2432 = vrot.lane.b32.xlu0 %v2359, 8
      %v2433 = vpop.permute.xlu0 %2432
      %2434 = vrot.lane.b32.xlu0 %v2362, 8
      %v2435 = vpop.permute.xlu0 %2434
      %2436 = vrot.lane.b32.xlu0 %v2364, 8
      %v2437 = vpop.permute.xlu0 %2436
      %2438 = vrot.lane.b32.xlu0 %v2367, 8
      %v2439 = vpop.permute.xlu0 %2438
      %2440 = vrot.lane.b32.xlu0 %v2369, 8
      %v2441 = vpop.permute.xlu0 %2440
      %2442 = vrot.lane.b32.xlu0 %v2372, 8
      %v2443 = vpop.permute.xlu0 %2442
      %2444 = vrot.lane.b32.xlu0 %v2374, 8
      %v2445 = vpop.permute.xlu0 %2444
      %2446 = vrot.lane.b32.xlu0 %v2377, 8
      %v2447 = vpop.permute.xlu0 %2446
      %2448 = vrot.lane.b32.xlu0 %v2379, 8
      %v2449 = vpop.permute.xlu0 %2448
      %2450 = vrot.lane.b32.xlu0 %v2382, 8
      %v2451 = vpop.permute.xlu0 %2450
      %2452 = vrot.lane.b32.xlu0 %v2384, 8
      %v2453 = vpop.permute.xlu0 %2452
      %2454 = vrot.lane.b32.xlu0 %v2387, 8
      %v2455 = vpop.permute.xlu0 %2454
      %2456 = vrot.lane.b32.xlu0 %v2389, 8
      %v2457 = vpop.permute.xlu0 %2456
      %2458 = vrot.lane.b32.xlu0 %v2392, 8
      %v2459 = vpop.permute.xlu0 %2458
      %2460 = vrot.lane.b32.xlu0 %v2394, 8
      %v2461 = vpop.permute.xlu0 %2460
      %2462 = vrot.lane.b32.xlu0 %v2397, 8
      %v2463 = vpop.permute.xlu0 %2462
      %2464 = vrot.lane.b32.xlu0 %v2399, 8
      %v2465 = vpop.permute.xlu0 %2464
      %2466 = vrot.lane.b32.xlu0 %v2402, 8
      %v2467 = vpop.permute.xlu0 %2466
      %2468 = vrot.lane.b32.xlu0 %v2404, 8
      %v2469 = vpop.permute.xlu0 %2468
      %2470 = vrot.lane.b32.xlu0 %v2407, 8
      %v2471 = vpop.permute.xlu0 %2470
      %2472 = vrot.lane.b32.xlu0 %v2409, 8
      %v2473 = vpop.permute.xlu0 %2472
      %2474 = vrot.lane.b32.xlu0 %v2412, 8
      %v2475 = vpop.permute.xlu0 %2474
      %2476 = vrot.lane.b32.xlu0 %v2414, 8
      %v2477 = vpop.permute.xlu0 %2476
      %2478 = vrot.lane.b32.xlu0 %v2417, 8
      %v2479 = vpop.permute.xlu0 %2478
      %2480 = vrot.lane.b32.xlu0 %v2419, 8
      %v2481 = vpop.permute.xlu0 %2480
      %2482 = vrot.lane.b32.xlu0 %v2422, 8
      %v2483 = vpop.permute.xlu0 %2482
      %2484 = vrot.lane.b32.xlu0 %v2424, 8
      %v2485 = vpop.permute.xlu0 %2484
      %2486 = vrot.lane.b32.xlu0 %v2427, 8
      %v2487 = vpop.permute.xlu0 %2486
      %2488 = vrot.lane.b32.xlu0 %v2429, 8
      %v2489 = vpop.permute.xlu0 %2488
      %2521 = vrot.lane.b32.xlu0 %v2128, 12
      %v2522 = vpop.permute.xlu0 %2521
      %2523 = vrot.lane.b32.xlu0 %v2035, 12
      %v2524 = vpop.permute.xlu0 %2523
      %2525 = vrot.lane.b32.xlu0 %v2129, 12
      %v2526 = vpop.permute.xlu0 %2525
      %2527 = vrot.lane.b32.xlu0 %v2038, 12
      %v2528 = vpop.permute.xlu0 %2527
      %2529 = vrot.lane.b32.xlu0 %v2130, 12
      %v2530 = vpop.permute.xlu0 %2529
      %2531 = vrot.lane.b32.xlu0 %v2041, 12
      %v2532 = vpop.permute.xlu0 %2531
      %2533 = vrot.lane.b32.xlu0 %v2131, 12
      %v2534 = vpop.permute.xlu0 %2533
      %2535 = vrot.lane.b32.xlu0 %v2044, 12
      %v2536 = vpop.permute.xlu0 %2535
      %2537 = vrot.lane.b32.xlu0 %v2132, 12
      %v2538 = vpop.permute.xlu0 %2537
      %2539 = vrot.lane.b32.xlu0 %v2047, 12
      %v2540 = vpop.permute.xlu0 %2539
      %2541 = vrot.lane.b32.xlu0 %v2133, 12
      %v2542 = vpop.permute.xlu0 %2541
      %2543 = vrot.lane.b32.xlu0 %v2050, 12
      %v2544 = vpop.permute.xlu0 %2543
      %2545 = vrot.lane.b32.xlu0 %v2134, 12
      %v2546 = vpop.permute.xlu0 %2545
      %2547 = vrot.lane.b32.xlu0 %v2053, 12
      %v2548 = vpop.permute.xlu0 %2547
      %2549 = vrot.lane.b32.xlu0 %v2135, 12
      %v2550 = vpop.permute.xlu0 %2549
      %2551 = vrot.lane.b32.xlu0 %v2056, 12
      %v2552 = vpop.permute.xlu0 %2551
      %2553 = vrot.lane.b32.xlu0 %v2136, 12
      %v2554 = vpop.permute.xlu0 %2553
      %2555 = vrot.lane.b32.xlu0 %v2059, 12
      %v2556 = vpop.permute.xlu0 %2555
      %2557 = vrot.lane.b32.xlu0 %v2137, 12
      %v2558 = vpop.permute.xlu0 %2557
      %2559 = vrot.lane.b32.xlu0 %v2062, 12
      %v2560 = vpop.permute.xlu0 %2559
      %2561 = vrot.lane.b32.xlu0 %v2138, 12
      %v2562 = vpop.permute.xlu0 %2561
      %2563 = vrot.lane.b32.xlu0 %v2065, 12
      %v2564 = vpop.permute.xlu0 %2563
      %2565 = vrot.lane.b32.xlu0 %v2139, 12
      %v2566 = vpop.permute.xlu0 %2565
      %2567 = vrot.lane.b32.xlu0 %v2068, 12
      %v2568 = vpop.permute.xlu0 %2567
      %2569 = vrot.lane.b32.xlu0 %v2140, 12
      %v2570 = vpop.permute.xlu0 %2569
      %2571 = vrot.lane.b32.xlu0 %v2071, 12
      %v2572 = vpop.permute.xlu0 %2571
      %2573 = vrot.lane.b32.xlu0 %v2141, 12
      %v2574 = vpop.permute.xlu0 %2573
      %2575 = vrot.lane.b32.xlu0 %v2074, 12
      %v2576 = vpop.permute.xlu0 %2575
      %2577 = vrot.lane.b32.xlu0 %v2142, 12
      %v2578 = vpop.permute.xlu0 %2577
      %2579 = vrot.lane.b32.xlu0 %v2077, 12
      %v2580 = vpop.permute.xlu0 %2579
      %2581 = vrot.lane.b32.xlu0 %v2143, 12
      %v2582 = vpop.permute.xlu0 %2581
      %2583 = vrot.lane.b32.xlu0 %v2080, 12
      %v2584 = vpop.permute.xlu0 %2583
      %v2618 = vrot.slane %v2143, 1
      %v2619 = vrot.slane %v2080, 1
      %v2620 = vsel %vm448, %v2618, %v2619
      %v2621 = vrot.slane %v2159, 1
      %v2622 = vsel %vm448, %v2619, %v2621
      %2623 = vrot.lane.b32.xlu0 %v2192, 16
      %v2624 = vpop.permute.xlu0 %2623
      %2625 = vrot.lane.b32.xlu0 %v2194, 16
      %v2626 = vpop.permute.xlu0 %2625
      %2627 = vrot.lane.b32.xlu0 %v2197, 16
      %v2628 = vpop.permute.xlu0 %2627
      %2629 = vrot.lane.b32.xlu0 %v2199, 16
      %v2630 = vpop.permute.xlu0 %2629
      %2631 = vrot.lane.b32.xlu0 %v2202, 16
      %v2632 = vpop.permute.xlu0 %2631
      %2633 = vrot.lane.b32.xlu0 %v2204, 16
      %v2634 = vpop.permute.xlu0 %2633
      %2635 = vrot.lane.b32.xlu0 %v2207, 16
      %v2636 = vpop.permute.xlu0 %2635
      %2637 = vrot.lane.b32.xlu0 %v2209, 16
      %v2638 = vpop.permute.xlu0 %2637
      %2639 = vrot.lane.b32.xlu0 %v2212, 16
      %v2640 = vpop.permute.xlu0 %2639
      %2641 = vrot.lane.b32.xlu0 %v2214, 16
      %v2642 = vpop.permute.xlu0 %2641
      %2643 = vrot.lane.b32.xlu0 %v2217, 16
      %v2644 = vpop.permute.xlu0 %2643
      %2645 = vrot.lane.b32.xlu0 %v2219, 16
      %v2646 = vpop.permute.xlu0 %2645
      %2647 = vrot.lane.b32.xlu0 %v2222, 16
      %v2648 = vpop.permute.xlu0 %2647
      %2649 = vrot.lane.b32.xlu0 %v2224, 16
      %v2650 = vpop.permute.xlu0 %2649
      %2651 = vrot.lane.b32.xlu0 %v2227, 16
      %v2652 = vpop.permute.xlu0 %2651
      %2653 = vrot.lane.b32.xlu0 %v2229, 16
      %v2654 = vpop.permute.xlu0 %2653
      %2655 = vrot.lane.b32.xlu0 %v2232, 16
      %v2656 = vpop.permute.xlu0 %2655
      %2657 = vrot.lane.b32.xlu0 %v2234, 16
      %v2658 = vpop.permute.xlu0 %2657
      %2659 = vrot.lane.b32.xlu0 %v2237, 16
      %v2660 = vpop.permute.xlu0 %2659
      %2661 = vrot.lane.b32.xlu0 %v2239, 16
      %v2662 = vpop.permute.xlu0 %2661
      %2663 = vrot.lane.b32.xlu0 %v2242, 16
      %v2664 = vpop.permute.xlu0 %2663
      %2665 = vrot.lane.b32.xlu0 %v2244, 16
      %v2666 = vpop.permute.xlu0 %2665
      %2667 = vrot.lane.b32.xlu0 %v2247, 16
      %v2668 = vpop.permute.xlu0 %2667
      %2669 = vrot.lane.b32.xlu0 %v2249, 16
      %v2670 = vpop.permute.xlu0 %2669
      %2671 = vrot.lane.b32.xlu0 %v2252, 16
      %v2672 = vpop.permute.xlu0 %2671
      %2673 = vrot.lane.b32.xlu0 %v2254, 16
      %v2674 = vpop.permute.xlu0 %2673
      %2675 = vrot.lane.b32.xlu0 %v2257, 16
      %v2676 = vpop.permute.xlu0 %2675
      %2677 = vrot.lane.b32.xlu0 %v2259, 16
      %v2678 = vpop.permute.xlu0 %2677
      %2679 = vrot.lane.b32.xlu0 %v2262, 16
      %v2680 = vpop.permute.xlu0 %2679
      %2681 = vrot.lane.b32.xlu0 %v2264, 16
      %v2682 = vpop.permute.xlu0 %2681
      %2683 = vrot.lane.b32.xlu0 %v2620, 16
      %v2684 = vpop.permute.xlu0 %2683
      %2685 = vrot.lane.b32.xlu0 %v2622, 16
      %v2686 = vpop.permute.xlu0 %2685
      %v2719 = vrot.slane %v2143, 2
      %v2720 = vrot.slane %v2080, 2
      %v2721 = vsel %vm619, %v2719, %v2720
      %v2722 = vrot.slane %v2159, 2
      %v2723 = vsel %vm619, %v2720, %v2722
      %2724 = vrot.lane.b32.xlu0 %v2357, 20
      %v2725 = vpop.permute.xlu0 %2724
      %2726 = vrot.lane.b32.xlu0 %v2359, 20
      %v2727 = vpop.permute.xlu0 %2726
      %2728 = vrot.lane.b32.xlu0 %v2362, 20
      %v2729 = vpop.permute.xlu0 %2728
      %2730 = vrot.lane.b32.xlu0 %v2364, 20
      %v2731 = vpop.permute.xlu0 %2730
      %2732 = vrot.lane.b32.xlu0 %v2367, 20
      %v2733 = vpop.permute.xlu0 %2732
      %2734 = vrot.lane.b32.xlu0 %v2369, 20
      %v2735 = vpop.permute.xlu0 %2734
      %2736 = vrot.lane.b32.xlu0 %v2372, 20
      %v2737 = vpop.permute.xlu0 %2736
      %2738 = vrot.lane.b32.xlu0 %v2374, 20
      %v2739 = vpop.permute.xlu0 %2738
      %2740 = vrot.lane.b32.xlu0 %v2377, 20
      %v2741 = vpop.permute.xlu0 %2740
      %2742 = vrot.lane.b32.xlu0 %v2379, 20
      %v2743 = vpop.permute.xlu0 %2742
      %2744 = vrot.lane.b32.xlu0 %v2382, 20
      %v2745 = vpop.permute.xlu0 %2744
      %2746 = vrot.lane.b32.xlu0 %v2384, 20
      %v2747 = vpop.permute.xlu0 %2746
      %2748 = vrot.lane.b32.xlu0 %v2387, 20
      %v2749 = vpop.permute.xlu0 %2748
      %2750 = vrot.lane.b32.xlu0 %v2389, 20
      %v2751 = vpop.permute.xlu0 %2750
      %2752 = vrot.lane.b32.xlu0 %v2392, 20
      %v2753 = vpop.permute.xlu0 %2752
      %2754 = vrot.lane.b32.xlu0 %v2394, 20
      %v2755 = vpop.permute.xlu0 %2754
      %2756 = vrot.lane.b32.xlu0 %v2397, 20
      %v2757 = vpop.permute.xlu0 %2756
      %2758 = vrot.lane.b32.xlu0 %v2399, 20
      %v2759 = vpop.permute.xlu0 %2758
      %2760 = vrot.lane.b32.xlu0 %v2402, 20
      %v2761 = vpop.permute.xlu0 %2760
      %2762 = vrot.lane.b32.xlu0 %v2404, 20
      %v2763 = vpop.permute.xlu0 %2762
      %2764 = vrot.lane.b32.xlu0 %v2407, 20
      %v2765 = vpop.permute.xlu0 %2764
      %2766 = vrot.lane.b32.xlu0 %v2409, 20
      %v2767 = vpop.permute.xlu0 %2766
      %2768 = vrot.lane.b32.xlu0 %v2412, 20
      %v2769 = vpop.permute.xlu0 %2768
      %2770 = vrot.lane.b32.xlu0 %v2414, 20
      %v2771 = vpop.permute.xlu0 %2770
      %2772 = vrot.lane.b32.xlu0 %v2417, 20
      %v2773 = vpop.permute.xlu0 %2772
      %2774 = vrot.lane.b32.xlu0 %v2419, 20
      %v2775 = vpop.permute.xlu0 %2774
      %2776 = vrot.lane.b32.xlu0 %v2422, 20
      %v2777 = vpop.permute.xlu0 %2776
      %2778 = vrot.lane.b32.xlu0 %v2424, 20
      %v2779 = vpop.permute.xlu0 %2778
      %2780 = vrot.lane.b32.xlu0 %v2427, 20
      %v2781 = vpop.permute.xlu0 %2780
      %2782 = vrot.lane.b32.xlu0 %v2429, 20
      %v2783 = vpop.permute.xlu0 %2782
      %2784 = vrot.lane.b32.xlu0 %v2721, 20
      %v2785 = vpop.permute.xlu0 %2784
      %2786 = vrot.lane.b32.xlu0 %v2723, 20
      %v2787 = vpop.permute.xlu0 %2786
      %2820 = vrot.lane.b32.xlu0 %v2129, 24
      %v2821 = vpop.permute.xlu0 %2820
      %2822 = vrot.lane.b32.xlu0 %v2038, 24
      %v2823 = vpop.permute.xlu0 %2822
      %2824 = vrot.lane.b32.xlu0 %v2130, 24
      %v2825 = vpop.permute.xlu0 %2824
      %2826 = vrot.lane.b32.xlu0 %v2041, 24
      %v2827 = vpop.permute.xlu0 %2826
      %2828 = vrot.lane.b32.xlu0 %v2131, 24
      %v2829 = vpop.permute.xlu0 %2828
      %2830 = vrot.lane.b32.xlu0 %v2044, 24
      %v2831 = vpop.permute.xlu0 %2830
      %2832 = vrot.lane.b32.xlu0 %v2132, 24
      %v2833 = vpop.permute.xlu0 %2832
      %2834 = vrot.lane.b32.xlu0 %v2047, 24
      %v2835 = vpop.permute.xlu0 %2834
      %2836 = vrot.lane.b32.xlu0 %v2133, 24
      %v2837 = vpop.permute.xlu0 %2836
      %2838 = vrot.lane.b32.xlu0 %v2050, 24
      %v2839 = vpop.permute.xlu0 %2838
      %2840 = vrot.lane.b32.xlu0 %v2134, 24
      %v2841 = vpop.permute.xlu0 %2840
      %2842 = vrot.lane.b32.xlu0 %v2053, 24
      %v2843 = vpop.permute.xlu0 %2842
      %2844 = vrot.lane.b32.xlu0 %v2135, 24
      %v2845 = vpop.permute.xlu0 %2844
      %2846 = vrot.lane.b32.xlu0 %v2056, 24
      %v2847 = vpop.permute.xlu0 %2846
      %2848 = vrot.lane.b32.xlu0 %v2136, 24
      %v2849 = vpop.permute.xlu0 %2848
      %2850 = vrot.lane.b32.xlu0 %v2059, 24
      %v2851 = vpop.permute.xlu0 %2850
      %2852 = vrot.lane.b32.xlu0 %v2137, 24
      %v2853 = vpop.permute.xlu0 %2852
      %2854 = vrot.lane.b32.xlu0 %v2062, 24
      %v2855 = vpop.permute.xlu0 %2854
      %2856 = vrot.lane.b32.xlu0 %v2138, 24
      %v2857 = vpop.permute.xlu0 %2856
      %2858 = vrot.lane.b32.xlu0 %v2065, 24
      %v2859 = vpop.permute.xlu0 %2858
      %2860 = vrot.lane.b32.xlu0 %v2139, 24
      %v2861 = vpop.permute.xlu0 %2860
      %2862 = vrot.lane.b32.xlu0 %v2068, 24
      %v2863 = vpop.permute.xlu0 %2862
      %2864 = vrot.lane.b32.xlu0 %v2140, 24
      %v2865 = vpop.permute.xlu0 %2864
      %2866 = vrot.lane.b32.xlu0 %v2071, 24
      %v2867 = vpop.permute.xlu0 %2866
      %2868 = vrot.lane.b32.xlu0 %v2141, 24
      %v2869 = vpop.permute.xlu0 %2868
      %2870 = vrot.lane.b32.xlu0 %v2074, 24
      %v2871 = vpop.permute.xlu0 %2870
      %2872 = vrot.lane.b32.xlu0 %v2142, 24
      %v2873 = vpop.permute.xlu0 %2872
      %2874 = vrot.lane.b32.xlu0 %v2077, 24
      %v2875 = vpop.permute.xlu0 %2874
      %2876 = vrot.lane.b32.xlu0 %v2143, 24
      %v2877 = vpop.permute.xlu0 %2876
      %2878 = vrot.lane.b32.xlu0 %v2080, 24
      %v2879 = vpop.permute.xlu0 %2878
      %2910 = vrot.lane.b32.xlu0 %v2197, 28
      %v2911 = vpop.permute.xlu0 %2910
      %2912 = vrot.lane.b32.xlu0 %v2199, 28
      %v2913 = vpop.permute.xlu0 %2912
      %2914 = vrot.lane.b32.xlu0 %v2202, 28
      %v2915 = vpop.permute.xlu0 %2914
      %2916 = vrot.lane.b32.xlu0 %v2204, 28
      %v2917 = vpop.permute.xlu0 %2916
      %2918 = vrot.lane.b32.xlu0 %v2207, 28
      %v2919 = vpop.permute.xlu0 %2918
      %2920 = vrot.lane.b32.xlu0 %v2209, 28
      %v2921 = vpop.permute.xlu0 %2920
      %2922 = vrot.lane.b32.xlu0 %v2212, 28
      %v2923 = vpop.permute.xlu0 %2922
      %2924 = vrot.lane.b32.xlu0 %v2214, 28
      %v2925 = vpop.permute.xlu0 %2924
      %2926 = vrot.lane.b32.xlu0 %v2217, 28
      %v2927 = vpop.permute.xlu0 %2926
      %2928 = vrot.lane.b32.xlu0 %v2219, 28
      %v2929 = vpop.permute.xlu0 %2928
      %2930 = vrot.lane.b32.xlu0 %v2222, 28
      %v2931 = vpop.permute.xlu0 %2930
      %2932 = vrot.lane.b32.xlu0 %v2224, 28
      %v2933 = vpop.permute.xlu0 %2932
      %2934 = vrot.lane.b32.xlu0 %v2227, 28
      %v2935 = vpop.permute.xlu0 %2934
      %2936 = vrot.lane.b32.xlu0 %v2229, 28
      %v2937 = vpop.permute.xlu0 %2936
      %2938 = vrot.lane.b32.xlu0 %v2232, 28
      %v2939 = vpop.permute.xlu0 %2938
      %2940 = vrot.lane.b32.xlu0 %v2234, 28
      %v2941 = vpop.permute.xlu0 %2940
      %2942 = vrot.lane.b32.xlu0 %v2237, 28
      %v2943 = vpop.permute.xlu0 %2942
      %2944 = vrot.lane.b32.xlu0 %v2239, 28
      %v2945 = vpop.permute.xlu0 %2944
      %2946 = vrot.lane.b32.xlu0 %v2242, 28
      %v2947 = vpop.permute.xlu0 %2946
      %2948 = vrot.lane.b32.xlu0 %v2244, 28
      %v2949 = vpop.permute.xlu0 %2948
      %2950 = vrot.lane.b32.xlu0 %v2247, 28
      %v2951 = vpop.permute.xlu0 %2950
      %2952 = vrot.lane.b32.xlu0 %v2249, 28
      %v2953 = vpop.permute.xlu0 %2952
      %2954 = vrot.lane.b32.xlu0 %v2252, 28
      %v2955 = vpop.permute.xlu0 %2954
      %2956 = vrot.lane.b32.xlu0 %v2254, 28
      %v2957 = vpop.permute.xlu0 %2956
      %2958 = vrot.lane.b32.xlu0 %v2257, 28
      %v2959 = vpop.permute.xlu0 %2958
      %2960 = vrot.lane.b32.xlu0 %v2259, 28
      %v2961 = vpop.permute.xlu0 %2960
      %2962 = vrot.lane.b32.xlu0 %v2262, 28
      %v2963 = vpop.permute.xlu0 %2962
      %2964 = vrot.lane.b32.xlu0 %v2264, 28
      %v2965 = vpop.permute.xlu0 %2964
      %2966 = vrot.lane.b32.xlu0 %v2620, 28
      %v2967 = vpop.permute.xlu0 %2966
      %2968 = vrot.lane.b32.xlu0 %v2622, 28
      %v2969 = vpop.permute.xlu0 %2968
      %3000 = vrot.lane.b32.xlu0 %v2362, 32
      %v3001 = vpop.permute.xlu0 %3000
      %3002 = vrot.lane.b32.xlu0 %v2364, 32
      %v3003 = vpop.permute.xlu0 %3002
      %3004 = vrot.lane.b32.xlu0 %v2367, 32
      %v3005 = vpop.permute.xlu0 %3004
      %3006 = vrot.lane.b32.xlu0 %v2369, 32
      %v3007 = vpop.permute.xlu0 %3006
      %3008 = vrot.lane.b32.xlu0 %v2372, 32
      %v3009 = vpop.permute.xlu0 %3008
      %3010 = vrot.lane.b32.xlu0 %v2374, 32
      %v3011 = vpop.permute.xlu0 %3010
      %3012 = vrot.lane.b32.xlu0 %v2377, 32
      %v3013 = vpop.permute.xlu0 %3012
      %3014 = vrot.lane.b32.xlu0 %v2379, 32
      %v3015 = vpop.permute.xlu0 %3014
      %3016 = vrot.lane.b32.xlu0 %v2382, 32
      %v3017 = vpop.permute.xlu0 %3016
      %3018 = vrot.lane.b32.xlu0 %v2384, 32
      %v3019 = vpop.permute.xlu0 %3018
      %3020 = vrot.lane.b32.xlu0 %v2387, 32
      %v3021 = vpop.permute.xlu0 %3020
      %3022 = vrot.lane.b32.xlu0 %v2389, 32
      %v3023 = vpop.permute.xlu0 %3022
      %3024 = vrot.lane.b32.xlu0 %v2392, 32
      %v3025 = vpop.permute.xlu0 %3024
      %3026 = vrot.lane.b32.xlu0 %v2394, 32
      %v3027 = vpop.permute.xlu0 %3026
      %3028 = vrot.lane.b32.xlu0 %v2397, 32
      %v3029 = vpop.permute.xlu0 %3028
      %3030 = vrot.lane.b32.xlu0 %v2399, 32
      %v3031 = vpop.permute.xlu0 %3030
      %3032 = vrot.lane.b32.xlu0 %v2402, 32
      %v3033 = vpop.permute.xlu0 %3032
      %3034 = vrot.lane.b32.xlu0 %v2404, 32
      %v3035 = vpop.permute.xlu0 %3034
      %3036 = vrot.lane.b32.xlu0 %v2407, 32
      %v3037 = vpop.permute.xlu0 %3036
      %3038 = vrot.lane.b32.xlu0 %v2409, 32
      %v3039 = vpop.permute.xlu0 %3038
      %3040 = vrot.lane.b32.xlu0 %v2412, 32
      %v3041 = vpop.permute.xlu0 %3040
      %3042 = vrot.lane.b32.xlu0 %v2414, 32
      %v3043 = vpop.permute.xlu0 %3042
      %3044 = vrot.lane.b32.xlu0 %v2417, 32
      %v3045 = vpop.permute.xlu0 %3044
      %3046 = vrot.lane.b32.xlu0 %v2419, 32
      %v3047 = vpop.permute.xlu0 %3046
      %3048 = vrot.lane.b32.xlu0 %v2422, 32
      %v3049 = vpop.permute.xlu0 %3048
      %3050 = vrot.lane.b32.xlu0 %v2424, 32
      %v3051 = vpop.permute.xlu0 %3050
      %3052 = vrot.lane.b32.xlu0 %v2427, 32
      %v3053 = vpop.permute.xlu0 %3052
      %3054 = vrot.lane.b32.xlu0 %v2429, 32
      %v3055 = vpop.permute.xlu0 %3054
      %3056 = vrot.lane.b32.xlu0 %v2721, 32
      %v3057 = vpop.permute.xlu0 %3056
      %3058 = vrot.lane.b32.xlu0 %v2723, 32
      %v3059 = vpop.permute.xlu0 %3058
      %v3090 = vsel %vm1369, %v2128, %v2266
      %v3091 = vsel %vm1369, %v2035, %v2268
      %v3092 = vsel %vm1369, %v2129, %v2270
      %v3093 = vsel %vm1369, %v2038, %v2272
      %v3094 = vsel %vm1369, %v2130, %v2274
      %v3095 = vsel %vm1369, %v2041, %v2276
      %v3096 = vsel %vm1369, %v2131, %v2278
      %v3097 = vsel %vm1369, %v2044, %v2280
      %v3098 = vsel %vm1369, %v2132, %v2282
      %v3099 = vsel %vm1369, %v2047, %v2284
      %v3100 = vsel %vm1369, %v2133, %v2286
      %v3101 = vsel %vm1369, %v2050, %v2288
      %v3102 = vsel %vm1369, %v2134, %v2290
      %v3103 = vsel %vm1369, %v2053, %v2292
      %v3104 = vsel %vm1369, %v2135, %v2294
      %v3105 = vsel %vm1369, %v2056, %v2296
      %v3106 = vsel %vm1369, %v2136, %v2298
      %v3107 = vsel %vm1369, %v2059, %v2300
      %v3108 = vsel %vm1369, %v2137, %v2302
      %v3109 = vsel %vm1369, %v2062, %v2304
      %v3110 = vsel %vm1369, %v2138, %v2306
      %v3111 = vsel %vm1369, %v2065, %v2308
      %v3112 = vsel %vm1369, %v2139, %v2310
      %v3113 = vsel %vm1369, %v2068, %v2312
      %v3114 = vsel %vm1369, %v2140, %v2314
      %v3115 = vsel %vm1369, %v2071, %v2316
      %v3116 = vsel %vm1369, %v2141, %v2318
      %v3117 = vsel %vm1369, %v2074, %v2320
      %v3118 = vsel %vm1369, %v2142, %v2322
      %v3119 = vsel %vm1369, %v2077, %v2324
      %v3120 = vsel %vm1401, %v3090, %v2431
      %v3121 = vsel %vm1401, %v3091, %v2433
      %v3122 = vsel %vm1401, %v3092, %v2435
      %v3123 = vsel %vm1401, %v3093, %v2437
      %v3124 = vsel %vm1401, %v3094, %v2439
      %v3125 = vsel %vm1401, %v3095, %v2441
      %v3126 = vsel %vm1401, %v3096, %v2443
      %v3127 = vsel %vm1401, %v3097, %v2445
      %v3128 = vsel %vm1401, %v3098, %v2447
      %v3129 = vsel %vm1401, %v3099, %v2449
      %v3130 = vsel %vm1401, %v3100, %v2451
      %v3131 = vsel %vm1401, %v3101, %v2453
      %v3132 = vsel %vm1401, %v3102, %v2455
      %v3133 = vsel %vm1401, %v3103, %v2457
      %v3134 = vsel %vm1401, %v3104, %v2459
      %v3135 = vsel %vm1401, %v3105, %v2461
      %v3136 = vsel %vm1401, %v3106, %v2463
      %v3137 = vsel %vm1401, %v3107, %v2465
      %v3138 = vsel %vm1401, %v3108, %v2467
      %v3139 = vsel %vm1401, %v3109, %v2469
      %v3140 = vsel %vm1401, %v3110, %v2471
      %v3141 = vsel %vm1401, %v3111, %v2473
      %v3142 = vsel %vm1401, %v3112, %v2475
      %v3143 = vsel %vm1401, %v3113, %v2477
      %v3144 = vsel %vm1401, %v3114, %v2479
      %v3145 = vsel %vm1401, %v3115, %v2481
      %v3146 = vsel %vm1401, %v3116, %v2483
      %v3147 = vsel %vm1401, %v3117, %v2485
      %v3148 = vsel %vm1401, %v3118, %v2487
      %v3149 = vsel %vm1401, %v3119, %v2489
      %v3150 = vsel %vm1433, %v1402, %v2522
      %v3151 = vsel %vm1433, %v1402, %v2524
      %v3152 = vsel %vm1433, %v3120, %v2526
      %v3153 = vsel %vm1433, %v3121, %v2528
      %v3154 = vsel %vm1433, %v3122, %v2530
      %v3155 = vsel %vm1433, %v3123, %v2532
      %v3156 = vsel %vm1433, %v3124, %v2534
      %v3157 = vsel %vm1433, %v3125, %v2536
      %v3158 = vsel %vm1433, %v3126, %v2538
      %v3159 = vsel %vm1433, %v3127, %v2540
      %v3160 = vsel %vm1433, %v3128, %v2542
      %v3161 = vsel %vm1433, %v3129, %v2544
      %v3162 = vsel %vm1433, %v3130, %v2546
      %v3163 = vsel %vm1433, %v3131, %v2548
      %v3164 = vsel %vm1433, %v3132, %v2550
      %v3165 = vsel %vm1433, %v3133, %v2552
      %v3166 = vsel %vm1433, %v3134, %v2554
      %v3167 = vsel %vm1433, %v3135, %v2556
      %v3168 = vsel %vm1433, %v3136, %v2558
      %v3169 = vsel %vm1433, %v3137, %v2560
      %v3170 = vsel %vm1433, %v3138, %v2562
      %v3171 = vsel %vm1433, %v3139, %v2564
      %v3172 = vsel %vm1433, %v3140, %v2566
      %v3173 = vsel %vm1433, %v3141, %v2568
      %v3174 = vsel %vm1433, %v3142, %v2570
      %v3175 = vsel %vm1433, %v3143, %v2572
      %v3176 = vsel %vm1433, %v3144, %v2574
      %v3177 = vsel %vm1433, %v3145, %v2576
      %v3178 = vsel %vm1433, %v3146, %v2578
      %v3179 = vsel %vm1433, %v3147, %v2580
      %v3180 = vsel %vm1433, %v3148, %v2582
      %v3181 = vsel %vm1433, %v3149, %v2584
      %v3182 = vsel %vm1466, %v3150, %v2624
      %v3183 = vsel %vm1466, %v3151, %v2626
      %v3184 = vsel %vm1466, %v3152, %v2628
      %v3185 = vsel %vm1466, %v3153, %v2630
      %v3186 = vsel %vm1466, %v3154, %v2632
      %v3187 = vsel %vm1466, %v3155, %v2634
      %v3188 = vsel %vm1466, %v3156, %v2636
      %v3189 = vsel %vm1466, %v3157, %v2638
      %v3190 = vsel %vm1466, %v3158, %v2640
      %v3191 = vsel %vm1466, %v3159, %v2642
      %v3192 = vsel %vm1466, %v3160, %v2644
      %v3193 = vsel %vm1466, %v3161, %v2646
      %v3194 = vsel %vm1466, %v3162, %v2648
      %v3195 = vsel %vm1466, %v3163, %v2650
      %v3196 = vsel %vm1466, %v3164, %v2652
      %v3197 = vsel %vm1466, %v3165, %v2654
      %v3198 = vsel %vm1466, %v3166, %v2656
      %v3199 = vsel %vm1466, %v3167, %v2658
      %v3200 = vsel %vm1466, %v3168, %v2660
      %v3201 = vsel %vm1466, %v3169, %v2662
      %v3202 = vsel %vm1466, %v3170, %v2664
      %v3203 = vsel %vm1466, %v3171, %v2666
      %v3204 = vsel %vm1466, %v3172, %v2668
      %v3205 = vsel %vm1466, %v3173, %v2670
      %v3206 = vsel %vm1466, %v3174, %v2672
      %v3207 = vsel %vm1466, %v3175, %v2674
      %v3208 = vsel %vm1466, %v3176, %v2676
      %v3209 = vsel %vm1466, %v3177, %v2678
      %v3210 = vsel %vm1466, %v3178, %v2680
      %v3211 = vsel %vm1466, %v3179, %v2682
      %v3212 = vsel %vm1466, %v3180, %v2684
      %v3213 = vsel %vm1466, %v3181, %v2686
      %v3214 = vsel %vm1499, %v3182, %v2725
      %v3215 = vsel %vm1499, %v3183, %v2727
      %v3216 = vsel %vm1499, %v3184, %v2729
      %v3217 = vsel %vm1499, %v3185, %v2731
      %v3218 = vsel %vm1499, %v3186, %v2733
      %v3219 = vsel %vm1499, %v3187, %v2735
      %v3220 = vsel %vm1499, %v3188, %v2737
      %v3221 = vsel %vm1499, %v3189, %v2739
      %v3222 = vsel %vm1499, %v3190, %v2741
      %v3223 = vsel %vm1499, %v3191, %v2743
      %v3224 = vsel %vm1499, %v3192, %v2745
      %v3225 = vsel %vm1499, %v3193, %v2747
      %v3226 = vsel %vm1499, %v3194, %v2749
      %v3227 = vsel %vm1499, %v3195, %v2751
      %v3228 = vsel %vm1499, %v3196, %v2753
      %v3229 = vsel %vm1499, %v3197, %v2755
      %v3230 = vsel %vm1499, %v3198, %v2757
      %v3231 = vsel %vm1499, %v3199, %v2759
      %v3232 = vsel %vm1499, %v3200, %v2761
      %v3233 = vsel %vm1499, %v3201, %v2763
      %v3234 = vsel %vm1499, %v3202, %v2765
      %v3235 = vsel %vm1499, %v3203, %v2767
      %v3236 = vsel %vm1499, %v3204, %v2769
      %v3237 = vsel %vm1499, %v3205, %v2771
      %v3238 = vsel %vm1499, %v3206, %v2773
      %v3239 = vsel %vm1499, %v3207, %v2775
      %v3240 = vsel %vm1499, %v3208, %v2777
      %v3241 = vsel %vm1499, %v3209, %v2779
      %v3242 = vsel %vm1499, %v3210, %v2781
      %v3243 = vsel %vm1499, %v3211, %v2783
      %v3244 = vsel %vm1499, %v3212, %v2785
      %v3245 = vsel %vm1499, %v3213, %v2787
      %v3246 = vsel %vm1532, %v3214, %v2821
      %v3247 = vsel %vm1532, %v3215, %v2823
      %v3248 = vsel %vm1532, %v3216, %v2825
      %v3249 = vsel %vm1532, %v3217, %v2827
      %v3250 = vsel %vm1532, %v3218, %v2829
      %v3251 = vsel %vm1532, %v3219, %v2831
      %v3252 = vsel %vm1532, %v3220, %v2833
      %v3253 = vsel %vm1532, %v3221, %v2835
      %v3254 = vsel %vm1532, %v3222, %v2837
      %v3255 = vsel %vm1532, %v3223, %v2839
      %v3256 = vsel %vm1532, %v3224, %v2841
      %v3257 = vsel %vm1532, %v3225, %v2843
      %v3258 = vsel %vm1532, %v3226, %v2845
      %v3259 = vsel %vm1532, %v3227, %v2847
      %v3260 = vsel %vm1532, %v3228, %v2849
      %v3261 = vsel %vm1532, %v3229, %v2851
      %v3262 = vsel %vm1532, %v3230, %v2853
      %v3263 = vsel %vm1532, %v3231, %v2855
      %v3264 = vsel %vm1532, %v3232, %v2857
      %v3265 = vsel %vm1532, %v3233, %v2859
      %v3266 = vsel %vm1532, %v3234, %v2861
      %v3267 = vsel %vm1532, %v3235, %v2863
      %v3268 = vsel %vm1532, %v3236, %v2865
      %v3269 = vsel %vm1532, %v3237, %v2867
      %v3270 = vsel %vm1532, %v3238, %v2869
      %v3271 = vsel %vm1532, %v3239, %v2871
      %v3272 = vsel %vm1532, %v3240, %v2873
      %v3273 = vsel %vm1532, %v3241, %v2875
      %v3274 = vsel %vm1532, %v3242, %v2877
      %v3275 = vsel %vm1532, %v3243, %v2879
      %v3276 = vsel %vm1532, %v3244, %v1151
      %v3277 = vsel %vm1532, %v3245, %v1151
      %v3278 = vsel %vm1565, %v3246, %v2911
      %v3279 = vsel %vm1565, %v3247, %v2913
      %v3280 = vsel %vm1565, %v3248, %v2915
      %v3281 = vsel %vm1565, %v3249, %v2917
      %v3282 = vsel %vm1565, %v3250, %v2919
      %v3283 = vsel %vm1565, %v3251, %v2921
      %v3284 = vsel %vm1565, %v3252, %v2923
      %v3285 = vsel %vm1565, %v3253, %v2925
      %v3286 = vsel %vm1565, %v3254, %v2927
      %v3287 = vsel %vm1565, %v3255, %v2929
      %v3288 = vsel %vm1565, %v3256, %v2931
      %v3289 = vsel %vm1565, %v3257, %v2933
      %v3290 = vsel %vm1565, %v3258, %v2935
      %v3291 = vsel %vm1565, %v3259, %v2937
      %v3292 = vsel %vm1565, %v3260, %v2939
      %v3293 = vsel %vm1565, %v3261, %v2941
      %v3294 = vsel %vm1565, %v3262, %v2943
      %v3295 = vsel %vm1565, %v3263, %v2945
      %v3296 = vsel %vm1565, %v3264, %v2947
      %v3297 = vsel %vm1565, %v3265, %v2949
      %v3298 = vsel %vm1565, %v3266, %v2951
      %v3299 = vsel %vm1565, %v3267, %v2953
      %v3300 = vsel %vm1565, %v3268, %v2955
      %v3301 = vsel %vm1565, %v3269, %v2957
      %v3302 = vsel %vm1565, %v3270, %v2959
      %v3303 = vsel %vm1565, %v3271, %v2961
      %v3304 = vsel %vm1565, %v3272, %v2963
      %v3305 = vsel %vm1565, %v3273, %v2965
      %v3306 = vsel %vm1565, %v3274, %v2967
      %v3307 = vsel %vm1565, %v3275, %v2969
      %v3308 = vsel %vm1565, %v3276, %v1244
      %v3309 = vsel %vm1565, %v3277, %v1244
      %v3310 = vsel %vm1598, %v3278, %v3001
      %v3311 = vsel %vm1598, %v3279, %v3003
      %v3312 = vsel %vm1598, %v3280, %v3005
      %v3313 = vsel %vm1598, %v3281, %v3007
      %v3314 = vsel %vm1598, %v3282, %v3009
      %v3315 = vsel %vm1598, %v3283, %v3011
      %v3316 = vsel %vm1598, %v3284, %v3013
      %v3317 = vsel %vm1598, %v3285, %v3015
      %v3318 = vsel %vm1598, %v3286, %v3017
      %v3319 = vsel %vm1598, %v3287, %v3019
      %v3320 = vsel %vm1598, %v3288, %v3021
      %v3321 = vsel %vm1598, %v3289, %v3023
      %v3322 = vsel %vm1598, %v3290, %v3025
      %v3323 = vsel %vm1598, %v3291, %v3027
      %v3324 = vsel %vm1598, %v3292, %v3029
      %v3325 = vsel %vm1598, %v3293, %v3031
      %v3326 = vsel %vm1598, %v3294, %v3033
      %v3327 = vsel %vm1598, %v3295, %v3035
      %v3328 = vsel %vm1598, %v3296, %v3037
      %v3329 = vsel %vm1598, %v3297, %v3039
      %v3330 = vsel %vm1598, %v3298, %v3041
      %v3331 = vsel %vm1598, %v3299, %v3043
      %v3332 = vsel %vm1598, %v3300, %v3045
      %v3333 = vsel %vm1598, %v3301, %v3047
      %v3334 = vsel %vm1598, %v3302, %v3049
      %v3335 = vsel %vm1598, %v3303, %v3051
      %v3336 = vsel %vm1598, %v3304, %v3053
      %v3337 = vsel %vm1598, %v3305, %v3055
      %v3338 = vsel %vm1598, %v3306, %v3057
      %v3339 = vsel %vm1598, %v3307, %v3059
      %v3340 = vsel %vm1598, %v3308, %v1337
      %v3341 = vsel %vm1598, %v3309, %v1337
      %v3342 = vld [vmem:[%s3] sm:$0xff]
      %v3343 = vld [vmem:[%s3 + $0x8] sm:$0xff]
      %v3344 = vld [vmem:[%s3 + $0x10] sm:$0xff]
      %v3345 = vld [vmem:[%s3 + $0x18] sm:$0xff]
      %v3346 = vld [vmem:[%s3 + $0x20] sm:$0xf]
      %v3347 = vld [vmem:[%s4] sm:$0x1]
      %v3349 = vlaneseq
      %v3350 = vshrl.u32 %v3349, 7
      %v3351 = vsub.s32 0, %v3350
      %v3352 = vrot.slane %v3347, %v3351
      %v3355 = vsel %vm1643, %v3310, 0
      %v3358 = vsel %vm1643, %v3311, 0
      %v3361 = vsel %vm1643, %v3312, 0
      %v3364 = vsel %vm1643, %v3313, 0
      %v3367 = vsel %vm1643, %v3314, 0
      %v3370 = vsel %vm1643, %v3315, 0
      %v3373 = vsel %vm1643, %v3316, 0
      %v3376 = vsel %vm1643, %v3317, 0
      %v3379 = vsel %vm1643, %v3318, 0
      %v3382 = vsel %vm1643, %v3319, 0
      %v3385 = vsel %vm1643, %v3320, 0
      %v3388 = vsel %vm1643, %v3321, 0
      %v3391 = vsel %vm1643, %v3322, 0
      %v3394 = vsel %vm1643, %v3323, 0
      %v3397 = vsel %vm1643, %v3324, 0
      %v3400 = vsel %vm1643, %v3325, 0
      %v3403 = vsel %vm1643, %v3326, 0
      %v3406 = vsel %vm1643, %v3327, 0
      %v3409 = vsel %vm1643, %v3328, 0
      %v3412 = vsel %vm1643, %v3329, 0
      %v3415 = vsel %vm1643, %v3330, 0
      %v3418 = vsel %vm1643, %v3331, 0
      %v3421 = vsel %vm1643, %v3332, 0
      %v3424 = vsel %vm1643, %v3333, 0
      %v3427 = vsel %vm1643, %v3334, 0
      %v3430 = vsel %vm1643, %v3335, 0
      %v3433 = vsel %vm1643, %v3336, 0
      %v3436 = vsel %vm1643, %v3337, 0
      %v3439 = vsel %vm1643, %v3338, 0
      %v3442 = vsel %vm1643, %v3339, 0
      %v3445 = vsel %vm1643, %v3340, 0
      %v3448 = vsel %vm1643, %v3341, 0
      %v3451 = vsel %vm1740, %v3346, 0
      %3453 = vmatprep.subr.mxu0 0.0
      %3454 = vmatpush1.msra.mxu0 %v3342
      %3455 = vmatprep.subr.mxu0 0.0
      %3456 = vmatpush1.msra.mxu0 %v3343
      %3457 = vmatprep.subr.mxu0 0.0
      %3458 = vmatpush1.msra.mxu0 %v3344
      %3459 = vmatprep.subr.mxu0 0.0
      %3460 = vmatpush1.msra.mxu0 %v3345
      %3461 = vmatprep.subr.mxu0 0.0
      %3462 = vmatpush1.msra.mxu0 %v3451
      %3463 = vmatprep.subr.mxu0 0.0
      %3464 = vmatpush1.msra.mxu0 0.0
      %3465 = vmatprep.subr.mxu0 0.0
      %3466 = vmatpush1.msra.mxu0 0.0
      %3467 = vmatprep.subr.mxu0 0.0
      %3468 = vmatpush1.msra.mxu0 0.0
      %3469 = vmatprep.subr.mxu0 0.0
      %3470 = vmatpush1.msra.mxu0 0.0
      %3471 = vmatprep.subr.mxu0 0.0
      %3472 = vmatpush1.msra.mxu0 0.0
      %3473 = vmatprep.subr.mxu0 0.0
      %3474 = vmatpush1.msra.mxu0 0.0
      %3475 = vmatprep.subr.mxu0 0.0
      %3476 = vmatpush1.msra.mxu0 0.0
      %3477 = vmatprep.subr.mxu0 0.0
      %3478 = vmatpush1.msra.mxu0 0.0
      %3479 = vmatprep.subr.mxu0 0.0
      %3480 = vmatpush1.msra.mxu0 0.0
      %3481 = vmatprep.subr.mxu0 0.0
      %3482 = vmatpush1.msra.mxu0 0.0
      %3483 = vmatprep.subr.mxu0 0.0
      %3484 = vmatpush1.msra.mxu0 0.0
      %3485 = vmatprep.subr.mxu0 0.0
      %3486 = vmatpush1.msra.mxu0 0.0
      %3487 = vmatprep.subr.mxu0 0.0
      %3488 = vmatpush1.msra.mxu0 0.0
      %3489 = vmatprep.subr.mxu0 0.0
      %3490 = vmatpush1.msra.mxu0 0.0
      %3491 = vmatprep.subr.mxu0 0.0
      %3492 = vmatpush1.msra.mxu0 0.0
      %3493 = vmatprep.subr.mxu0 0.0
      %3494 = vmatpush1.msra.mxu0 0.0
      %3495 = vmatprep.subr.mxu0 0.0
      %3496 = vmatpush1.msra.mxu0 0.0
      %3497 = vmatprep.subr.mxu0 0.0
      %3498 = vmatpush1.msra.mxu0 0.0
      %3499 = vmatprep.subr.mxu0 0.0
      %3500 = vmatpush1.msra.mxu0 0.0
      %3501 = vmatprep.subr.mxu0 0.0
      %3502 = vmatpush1.msra.mxu0 0.0
      %3503 = vmatprep.subr.mxu0 0.0
      %3504 = vmatpush1.msra.mxu0 0.0
      %3505 = vmatprep.subr.mxu0 0.0
      %3506 = vmatpush1.msra.mxu0 0.0
      %3507 = vmatprep.subr.mxu0 0.0
      %3508 = vmatpush1.msra.mxu0 0.0
      %3509 = vmatprep.subr.mxu0 0.0
      %3510 = vmatpush1.msra.mxu0 0.0
      %3511 = vmatprep.subr.mxu0 0.0
      %3512 = vmatpush1.msra.mxu0 0.0
      %3513 = vmatprep.subr.mxu0 0.0
      %3514 = vmatpush1.msra.mxu0 0.0
      %3515 = vmatprep.subr.mxu0 0.0
      %3516 = vmatpush1.msra.mxu0 0.0
      %3517 = vmatprep.mubr.f32.mxu0 0.0
      %3518 = vmatmul.mubr.f32.gmra.mrb[0].mxu0 %v3355
      %v3519 = vpop.f32.mrb[0].mxu0
      %v3520 = vadd.f32 %v3352, %v3519
      %v3521 = vpop.f32.mrb[0].mxu0
      %3522 = vmatprep.mubr.f32.mxu0 0.0
      %3523 = vmatmul.mubr.f32.gmra.mrb[0].mxu0 %v3358
      %v3524 = vpop.f32.mrb[0].mxu0
      %v3525 = vadd.f32 %v3352, %v3524
      %v3526 = vpop.f32.mrb[0].mxu0
      %3527 = vmatprep.mubr.f32.mxu0 0.0
      %3528 = vmatmul.mubr.f32.gmra.mrb[0].mxu0 %v3361
      %v3529 = vpop.f32.mrb[0].mxu0
      %v3530 = vadd.f32 %v3352, %v3529
      %v3531 = vpop.f32.mrb[0].mxu0
      %3532 = vmatprep.mubr.f32.mxu0 0.0
      %3533 = vmatmul.mubr.f32.gmra.mrb[0].mxu0 %v3364
      %v3534 = vpop.f32.mrb[0].mxu0
      %v3535 = vadd.f32 %v3352, %v3534
      %v3536 = vpop.f32.mrb[0].mxu0
      %3537 = vmatprep.mubr.f32.mxu0 0.0
      %3538 = vmatmul.mubr.f32.gmra.mrb[0].mxu0 %v3367
      %v3539 = vpop.f32.mrb[0].mxu0
      %v3540 = vadd.f32 %v3352, %v3539
      %v3541 = vpop.f32.mrb[0].mxu0
      %3542 = vmatprep.mubr.f32.mxu0 0.0
      %3543 = vmatmul.mubr.f32.gmra.mrb[0].mxu0 %v3370
      %v3544 = vpop.f32.mrb[0].mxu0
      %v3545 = vadd.f32 %v3352, %v3544
      %v3546 = vpop.f32.mrb[0].mxu0
      %3547 = vmatprep.mubr.f32.mxu0 0.0
      %3548 = vmatmul.mubr.f32.gmra.mrb[0].mxu0 %v3373
      %v3549 = vpop.f32.mrb[0].mxu0
      %v3550 = vadd.f32 %v3352, %v3549
      %v3551 = vpop.f32.mrb[0].mxu0
      %3552 = vmatprep.mubr.f32.mxu0 0.0
      %3553 = vmatmul.mubr.f32.gmra.mrb[0].mxu0 %v3376
      %v3554 = vpop.f32.mrb[0].mxu0
      %v3555 = vadd.f32 %v3352, %v3554
      %v3556 = vpop.f32.mrb[0].mxu0
      %3557 = vmatprep.mubr.f32.mxu0 0.0
      %3558 = vmatmul.mubr.f32.gmra.mrb[0].mxu0 %v3379
      %v3559 = vpop.f32.mrb[0].mxu0
      %v3560 = vadd.f32 %v3352, %v3559
      %v3561 = vpop.f32.mrb[0].mxu0
      %3562 = vmatprep.mubr.f32.mxu0 0.0
      %3563 = vmatmul.mubr.f32.gmra.mrb[0].mxu0 %v3382
      %v3564 = vpop.f32.mrb[0].mxu0
      %v3565 = vadd.f32 %v3352, %v3564
      %v3566 = vpop.f32.mrb[0].mxu0
      %3567 = vmatprep.mubr.f32.mxu0 0.0
      %3568 = vmatmul.mubr.f32.gmra.mrb[0].mxu0 %v3385
      %v3569 = vpop.f32.mrb[0].mxu0
      %v3570 = vadd.f32 %v3352, %v3569
      %v3571 = vpop.f32.mrb[0].mxu0
      %3572 = vmatprep.mubr.f32.mxu0 0.0
      %3573 = vmatmul.mubr.f32.gmra.mrb[0].mxu0 %v3388
      %v3574 = vpop.f32.mrb[0].mxu0
      %v3575 = vadd.f32 %v3352, %v3574
      %v3576 = vpop.f32.mrb[0].mxu0
      %3577 = vmatprep.mubr.f32.mxu0 0.0
      %3578 = vmatmul.mubr.f32.gmra.mrb[0].mxu0 %v3391
      %v3579 = vpop.f32.mrb[0].mxu0
      %v3580 = vadd.f32 %v3352, %v3579
      %v3581 = vpop.f32.mrb[0].mxu0
      %3582 = vmatprep.mubr.f32.mxu0 0.0
      %3583 = vmatmul.mubr.f32.gmra.mrb[0].mxu0 %v3394
      %v3584 = vpop.f32.mrb[0].mxu0
      %v3585 = vadd.f32 %v3352, %v3584
      %v3586 = vpop.f32.mrb[0].mxu0
      %3587 = vmatprep.mubr.f32.mxu0 0.0
      %3588 = vmatmul.mubr.f32.gmra.mrb[0].mxu0 %v3397
      %v3589 = vpop.f32.mrb[0].mxu0
      %v3590 = vadd.f32 %v3352, %v3589
      %v3591 = vpop.f32.mrb[0].mxu0
      %3592 = vmatprep.mubr.f32.mxu0 0.0
      %3593 = vmatmul.mubr.f32.gmra.mrb[0].mxu0 %v3400
      %v3594 = vpop.f32.mrb[0].mxu0
      %v3595 = vadd.f32 %v3352, %v3594
      %v3596 = vpop.f32.mrb[0].mxu0
      %3597 = vmatprep.mubr.f32.mxu0 0.0
      %3598 = vmatmul.mubr.f32.gmra.mrb[0].mxu0 %v3403
      %v3599 = vpop.f32.mrb[0].mxu0
      %v3600 = vadd.f32 %v3352, %v3599
      %v3601 = vpop.f32.mrb[0].mxu0
      %3602 = vmatprep.mubr.f32.mxu0 0.0
      %3603 = vmatmul.mubr.f32.gmra.mrb[0].mxu0 %v3406
      %v3604 = vpop.f32.mrb[0].mxu0
      %v3605 = vadd.f32 %v3352, %v3604
      %v3606 = vpop.f32.mrb[0].mxu0
      %3607 = vmatprep.mubr.f32.mxu0 0.0
      %3608 = vmatmul.mubr.f32.gmra.mrb[0].mxu0 %v3409
      %v3609 = vpop.f32.mrb[0].mxu0
      %v3610 = vadd.f32 %v3352, %v3609
      %v3611 = vpop.f32.mrb[0].mxu0
      %3612 = vmatprep.mubr.f32.mxu0 0.0
      %3613 = vmatmul.mubr.f32.gmra.mrb[0].mxu0 %v3412
      %v3614 = vpop.f32.mrb[0].mxu0
      %v3615 = vadd.f32 %v3352, %v3614
      %v3616 = vpop.f32.mrb[0].mxu0
      %3617 = vmatprep.mubr.f32.mxu0 0.0
      %3618 = vmatmul.mubr.f32.gmra.mrb[0].mxu0 %v3415
      %v3619 = vpop.f32.mrb[0].mxu0
      %v3620 = vadd.f32 %v3352, %v3619
      %v3621 = vpop.f32.mrb[0].mxu0
      %3622 = vmatprep.mubr.f32.mxu0 0.0
      %3623 = vmatmul.mubr.f32.gmra.mrb[0].mxu0 %v3418
      %v3624 = vpop.f32.mrb[0].mxu0
      %v3625 = vadd.f32 %v3352, %v3624
      %v3626 = vpop.f32.mrb[0].mxu0
      %3627 = vmatprep.mubr.f32.mxu0 0.0
      %3628 = vmatmul.mubr.f32.gmra.mrb[0].mxu0 %v3421
      %v3629 = vpop.f32.mrb[0].mxu0
      %v3630 = vadd.f32 %v3352, %v3629
      %v3631 = vpop.f32.mrb[0].mxu0
      %3632 = vmatprep.mubr.f32.mxu0 0.0
      %3633 = vmatmul.mubr.f32.gmra.mrb[0].mxu0 %v3424
      %v3634 = vpop.f32.mrb[0].mxu0
      %v3635 = vadd.f32 %v3352, %v3634
      %v3636 = vpop.f32.mrb[0].mxu0
      %3637 = vmatprep.mubr.f32.mxu0 0.0
      %3638 = vmatmul.mubr.f32.gmra.mrb[0].mxu0 %v3427
      %v3639 = vpop.f32.mrb[0].mxu0
      %v3640 = vadd.f32 %v3352, %v3639
      %v3641 = vpop.f32.mrb[0].mxu0
      %3642 = vmatprep.mubr.f32.mxu0 0.0
      %3643 = vmatmul.mubr.f32.gmra.mrb[0].mxu0 %v3430
      %v3644 = vpop.f32.mrb[0].mxu0
      %v3645 = vadd.f32 %v3352, %v3644
      %v3646 = vpop.f32.mrb[0].mxu0
      %3647 = vmatprep.mubr.f32.mxu0 0.0
      %3648 = vmatmul.mubr.f32.gmra.mrb[0].mxu0 %v3433
      %v3649 = vpop.f32.mrb[0].mxu0
      %v3650 = vadd.f32 %v3352, %v3649
      %v3651 = vpop.f32.mrb[0].mxu0
      %3652 = vmatprep.mubr.f32.mxu0 0.0
      %3653 = vmatmul.mubr.f32.gmra.mrb[0].mxu0 %v3436
      %v3654 = vpop.f32.mrb[0].mxu0
      %v3655 = vadd.f32 %v3352, %v3654
      %v3656 = vpop.f32.mrb[0].mxu0
      %3657 = vmatprep.mubr.f32.mxu0 0.0
      %3658 = vmatmul.mubr.f32.gmra.mrb[0].mxu0 %v3439
      %v3659 = vpop.f32.mrb[0].mxu0
      %v3660 = vadd.f32 %v3352, %v3659
      %v3661 = vpop.f32.mrb[0].mxu0
      %3662 = vmatprep.mubr.f32.mxu0 0.0
      %3663 = vmatmul.mubr.f32.gmra.mrb[0].mxu0 %v3442
      %v3664 = vpop.f32.mrb[0].mxu0
      %v3665 = vadd.f32 %v3352, %v3664
      %v3666 = vpop.f32.mrb[0].mxu0
      %3667 = vmatprep.mubr.f32.mxu0 0.0
      %3668 = vmatmul.mubr.f32.gmra.mrb[0].mxu0 %v3445
      %v3669 = vpop.f32.mrb[0].mxu0
      %v3670 = vadd.f32 %v3352, %v3669
      %v3671 = vpop.f32.mrb[0].mxu0
      %3672 = vmatprep.mubr.f32.mxu0 0.0
      %3673 = vmatmul.mubr.f32.gmra.mrb[0].mxu0 %v3448
      %v3674 = vpop.f32.mrb[0].mxu0
      %v3675 = vadd.f32 %v3352, %v3674
      %v3676 = vpop.f32.mrb[0].mxu0
      %3677 = vdwg.mxu0
      %v3678 = vadd.f32 %v3520, %v225
      %v3679 = vadd.f32 %v3525, %v226
      %v3680 = vadd.f32 %v3530, %v227
      %v3681 = vadd.f32 %v3535, %v228
      %v3682 = vadd.f32 %v3540, %v229
      %v3683 = vadd.f32 %v3545, %v230
      %v3684 = vadd.f32 %v3550, %v231
      %v3685 = vadd.f32 %v3555, %v232
      %v3686 = vadd.f32 %v3560, %v233
      %v3687 = vadd.f32 %v3565, %v234
      %v3688 = vadd.f32 %v3570, %v235
      %v3689 = vadd.f32 %v3575, %v236
      %v3690 = vadd.f32 %v3580, %v237
      %v3691 = vadd.f32 %v3585, %v238
      %v3692 = vadd.f32 %v3590, %v239
      %v3693 = vadd.f32 %v3595, %v240
      %v3694 = vadd.f32 %v3600, %v241
      %v3695 = vadd.f32 %v3605, %v242
      %v3696 = vadd.f32 %v3610, %v243
      %v3697 = vadd.f32 %v3615, %v244
      %v3698 = vadd.f32 %v3620, %v245
      %v3699 = vadd.f32 %v3625, %v246
      %v3700 = vadd.f32 %v3630, %v247
      %v3701 = vadd.f32 %v3635, %v248
      %v3702 = vadd.f32 %v3640, %v249
      %v3703 = vadd.f32 %v3645, %v250
      %v3704 = vadd.f32 %v3650, %v251
      %v3705 = vadd.f32 %v3655, %v252
      %v3706 = vadd.f32 %v3660, %v253
      %v3707 = vadd.f32 %v3665, %v254
      %v3708 = vadd.f32 %v3670, %v255
      %v3709 = vadd.f32 %v3675, %v256
      %v3710 = vmax.f32 %v3678, 0.0
      %v3711 = vmax.f32 %v3679, 0.0
      %v3712 = vmax.f32 %v3680, 0.0
      %v3713 = vmax.f32 %v3681, 0.0
      %v3714 = vmax.f32 %v3682, 0.0
      %v3715 = vmax.f32 %v3683, 0.0
      %v3716 = vmax.f32 %v3684, 0.0
      %v3717 = vmax.f32 %v3685, 0.0
      %v3718 = vmax.f32 %v3686, 0.0
      %v3719 = vmax.f32 %v3687, 0.0
      %v3720 = vmax.f32 %v3688, 0.0
      %v3721 = vmax.f32 %v3689, 0.0
      %v3722 = vmax.f32 %v3690, 0.0
      %v3723 = vmax.f32 %v3691, 0.0
      %v3724 = vmax.f32 %v3692, 0.0
      %v3725 = vmax.f32 %v3693, 0.0
      %v3726 = vmax.f32 %v3694, 0.0
      %v3727 = vmax.f32 %v3695, 0.0
      %v3728 = vmax.f32 %v3696, 0.0
      %v3729 = vmax.f32 %v3697, 0.0
      %v3730 = vmax.f32 %v3698, 0.0
      %v3731 = vmax.f32 %v3699, 0.0
      %v3732 = vmax.f32 %v3700, 0.0
      %v3733 = vmax.f32 %v3701, 0.0
      %v3734 = vmax.f32 %v3702, 0.0
      %v3735 = vmax.f32 %v3703, 0.0
      %v3736 = vmax.f32 %v3704, 0.0
      %v3737 = vmax.f32 %v3705, 0.0
      %v3738 = vmax.f32 %v3706, 0.0
      %v3739 = vmax.f32 %v3707, 0.0
      %v3740 = vmax.f32 %v3708, 0.0
      %v3741 = vmax.f32 %v3709, 0.0
      %3742 = vst.msk [vmem:[%s224] sm:$0xff] %vm1369, %v3710
      %3743 = vst.msk [vmem:[%s224 + $0x8] sm:$0xff] %vm1369, %v3711
      %3744 = vst.msk [vmem:[%s224 + $0x10] sm:$0xff] %vm1369, %v3712
      %3745 = vst.msk [vmem:[%s224 + $0x18] sm:$0xff] %vm1369, %v3713
      %3746 = vst.msk [vmem:[%s224 + $0x20] sm:$0xff] %vm1369, %v3714
      %3747 = vst.msk [vmem:[%s224 + $0x28] sm:$0xff] %vm1369, %v3715
      %3748 = vst.msk [vmem:[%s224 + $0x30] sm:$0xff] %vm1369, %v3716
      %3749 = vst.msk [vmem:[%s224 + $0x38] sm:$0xff] %vm1369, %v3717
      %3750 = vst.msk [vmem:[%s224 + $0x40] sm:$0xff] %vm1369, %v3718
      %3751 = vst.msk [vmem:[%s224 + $0x48] sm:$0xff] %vm1369, %v3719
      %3752 = vst.msk [vmem:[%s224 + $0x50] sm:$0xff] %vm1369, %v3720
      %3753 = vst.msk [vmem:[%s224 + $0x58] sm:$0xff] %vm1369, %v3721
      %3754 = vst.msk [vmem:[%s224 + $0x60] sm:$0xff] %vm1369, %v3722
      %3755 = vst.msk [vmem:[%s224 + $0x68] sm:$0xff] %vm1369, %v3723
      %3756 = vst.msk [vmem:[%s224 + $0x70] sm:$0xff] %vm1369, %v3724
      %3757 = vst.msk [vmem:[%s224 + $0x78] sm:$0xff] %vm1369, %v3725
      %3758 = vst.msk [vmem:[%s224 + $0x80] sm:$0xff] %vm1369, %v3726
      %3759 = vst.msk [vmem:[%s224 + $0x88] sm:$0xff] %vm1369, %v3727
      %3760 = vst.msk [vmem:[%s224 + $0x90] sm:$0xff] %vm1369, %v3728
      %3761 = vst.msk [vmem:[%s224 + $0x98] sm:$0xff] %vm1369, %v3729
      %3762 = vst.msk [vmem:[%s224 + $0xa0] sm:$0xff] %vm1369, %v3730
      %3763 = vst.msk [vmem:[%s224 + $0xa8] sm:$0xff] %vm1369, %v3731
      %3764 = vst.msk [vmem:[%s224 + $0xb0] sm:$0xff] %vm1369, %v3732
      %3765 = vst.msk [vmem:[%s224 + $0xb8] sm:$0xff] %vm1369, %v3733
      %3766 = vst.msk [vmem:[%s224 + $0xc0] sm:$0xff] %vm1369, %v3734
      %3767 = vst.msk [vmem:[%s224 + $0xc8] sm:$0xff] %vm1369, %v3735
      %3768 = vst.msk [vmem:[%s224 + $0xd0] sm:$0xff] %vm1369, %v3736
      %3769 = vst.msk [vmem:[%s224 + $0xd8] sm:$0xff] %vm1369, %v3737
      %3770 = vst.msk [vmem:[%s224 + $0xe0] sm:$0xff] %vm1369, %v3738
      %3771 = vst.msk [vmem:[%s224 + $0xe8] sm:$0xff] %vm1369, %v3739
      %3772 = vst.msk [vmem:[%s224 + $0xf0] sm:$0xff] %vm1369, %v3740
      %3773 = vst.msk [vmem:[%s224 + $0xf8] sm:$0xff] %vm1369, %v3741
      %p3774 = scmp.lt.s32.totalorder %s16, 1
      %s3775 = scalar_select %p3774, %s16, 1
      %s3776 = smul.addr %s3775, 32
      %s3777 = smul.addr %s3776, 8
      %s3778 = scalar_lea.vmem %s5, %s3777
      // Predicated region
      $region41: #{tpu_custom_call.1} parent=39 // pred_check
        %p3779 = pneg %p144
      $region42: #{tpu_custom_call.1} parent=39 // pred_check_branch
        %3781 = sbr.rel (%p3779) target = $region44
      $region43: #{tpu_custom_call.1} parent=39 // pred_region
        _
      $region44: #{tpu_custom_call.1} parent=39 // pred_fallthru
        _
    $region40: #{tpu_custom_call.1} parent=5 // pred_fallthru
      _
    %p3782 = scmp.le.s32.totalorder 2, %s11
    // Predicated region
    $region45: #{tpu_custom_call.1} parent=5 // pred_check
      %p3783 = pneg %p3782
    $region46: #{tpu_custom_call.1} parent=5 // pred_check_branch
      %3785 = sbr.rel (%p3783) target = $region48
    $region47: #{tpu_custom_call.1} parent=5 // pred_region
      %s3786 = ssub.s32 %s11, 2
      // Predicated region
      $region49: #{tpu_custom_call.1} parent=47 // pred_check
        %p3787 = pneg %p150
      $region50: #{tpu_custom_call.1} parent=47 // pred_check_branch
        %3789 = sbr.rel (%p3787) target = $region52
      $region51: #{tpu_custom_call.1} parent=47 // pred_region
        %p3790 = scmp.lt.s32.totalorder %s17, 1
        %s3791 = scalar_select %p3790, %s17, 1
        %s3792 = smul.addr %s3791, 32
        %s3793 = smul.addr %s3792, 8
        %s3794 = scalar_lea.vmem %s5, %s3793
      $region52: #{tpu_custom_call.1} parent=47 // pred_fallthru
        _
    $region48: #{tpu_custom_call.1} parent=5 // pred_fallthru
      _
  $region6: #{tpu_custom_call.1} parent=0 // loop_footer
    %s15 = sadd.s32 1, %s11
  $region7: #{tpu_custom_call.1} parent=0 // loop_footer_branch
    %10 = sbr.rel target = $region3
  $region8: #{tpu_custom_call.1} parent=0 // loop_exit
    _

</llo_original>
